<compile_context>
chip_gen: v5e
topology: v5e:2x2
jax: 0.10.0
libtpu: 0.0.40
codegen_flags: <defaults>
</compile_context>

<pallas_src>
import functools

import jax
import jax.numpy as jnp
from jax.experimental import pallas as pl
from jax.experimental.pallas import tpu as pltpu


def _featcae_kernel(
    x_ref,
    w1_ref, t1_ref,
    w2_ref, t2_ref,
    w34_ref, t4_ref,
    w5_ref, t5_ref,
    w6_ref, b6_ref,
    o_ref,
    *, imgs_per_step, c_in,
):
    cdt = w1_ref.dtype          # compute (MXU operand) dtype: bf16 (default) or f32

    # Static unroll over the images packed into this block (imgs_per_step is a
    # small compile-time constant, so all slices below are static).
    for p in range(imgs_per_step):
        r0 = p * c_in
        x = x_ref[r0:r0 + c_in, :].astype(cdt)   # (C_in, T), cast in-kernel

        # ----- encoder conv1 (+ folded BN scale in W) + shift + ReLU -----
        h = jnp.dot(w1_ref[...], x, preferred_element_type=jnp.float32)
        h = jnp.maximum(h + t1_ref[...], 0.0)

        # ----- encoder conv2 + shift + ReLU -----
        h = jnp.dot(w2_ref[...], h.astype(cdt), preferred_element_type=jnp.float32)
        h = jnp.maximum(h + t2_ref[...], 0.0)

        # ----- encoder conv3 + decoder conv1 (algebraically fused) + shift + ReLU
        h = jnp.dot(w34_ref[...], h.astype(cdt), preferred_element_type=jnp.float32)
        h = jnp.maximum(h + t4_ref[...], 0.0)

        # ----- decoder conv2 + shift + ReLU -----
        h = jnp.dot(w5_ref[...], h.astype(cdt), preferred_element_type=jnp.float32)
        h = jnp.maximum(h + t5_ref[...], 0.0)

        # ----- decoder conv3 + bias -----
        y = jnp.dot(w6_ref[...], h.astype(cdt), preferred_element_type=jnp.float32)
        o_ref[r0:r0 + c_in, :] = (y + b6_ref[...]).astype(o_ref.dtype)


def _fold_bn(bias, gamma, beta, mean, var, eps=1e-5):
    """Fold conv bias + eval-mode BatchNorm into per-channel scale/shift."""
    scale = gamma / jnp.sqrt(var + eps)
    shift = (bias - mean) * scale + beta
    return scale, shift


def _choose_tiling(n, hw, hw_tile_req):
    """Pick (imgs_per_step, hw_tile, hw_pad) for the (N*C, H*W) layout."""
    lane = 128
    if hw % lane == 0 and hw <= hw_tile_req:
        # Whole pixel row per step; pack several images per grid step to
        # amortize per-step overhead and MXU weight pushes.
        p = max(1, min(n, hw_tile_req // hw))
        while p > 1 and n % p:
            p -= 1
        # Keep >= 2 parallel grid steps when possible (v7x has 2 TensorCores).
        while p > 1 and n // p < 2:
            p -= 1
            while p > 1 and n % p:
                p -= 1
        return p, hw, hw
    # Tile the pixel axis; prefer a tile size that divides H*W exactly so the
    # wrapper never pads the input or slices the output (extra HBM traffic).
    hw_tile = max(lane, min(hw_tile_req // lane, pl.cdiv(hw, lane)) * lane)
    if hw % lane == 0:
        t = hw_tile
        while t > lane and hw % t:
            t -= lane
        hw_tile = t
    hw_pad = pl.cdiv(hw, hw_tile) * hw_tile
    return 1, hw_tile, hw_pad


def featcae_forward(x_nchw, layers, *, hw_tile=2048,
                    compute_dtype=jnp.bfloat16, out_dtype=jnp.float32):
    """x_nchw: (N, C_in, H, W) float32 -> (N, C_in, H, W) out_dtype."""
    n, c_in, h, w = x_nchw.shape
    hw = h * w
    (w1, s1, t1), (w2, s2, t2), (w3, b3), (w4, s4, t4), (w5, s5, t5), (w6, b6) = layers

    cdt = jnp.dtype(compute_dtype)
    assert c_in % 8 == 0, "in_channels must be a multiple of 8 (sublane tile)"
    h1c, h2c = w1.shape[1], w2.shape[1]

    # --- algebraic fusion of enc conv3 / dec conv1 (done once per call) ---
    hi = jax.lax.Precision.HIGHEST
    w34 = jnp.dot(w3, w4, precision=hi)                 # (h2, h2)
    t4p = t4 + jnp.dot(b3, w4, precision=hi) * s4       # fold b3 into shift

    # Fold the BN scale into the transposed weights (once, on the XLA side) so
    # the kernel epilogue per layer is just max(h + shift, 0).
    def wT_scaled(wgt, scale=None):                     # (ci,co) -> (co,ci)
        wt = wgt.T
        if scale is not None:
            wt = scale[:, None] * wt
        return wt.astype(cdt)

    def col(v):                                         # per-channel -> (co,1) f32
        return v[:, None].astype(jnp.float32)

    ops = (wT_scaled(w1, s1), col(t1),
           wT_scaled(w2, s2), col(t2),
           wT_scaled(w34, s4), col(t4p),
           wT_scaled(w5, s5), col(t5),
           wT_scaled(w6), col(b6))

    # Pixels on lanes: NCHW -> (N*C, H*W) is a free reshape.  No wrapper-side
    # dtype cast: the f32->bf16 cast happens inside the kernel.
    x2d = x_nchw.reshape(n * c_in, hw)

    imgs_per_step, hw_tile, hw_pad = _choose_tiling(n, hw, hw_tile)
    if hw_pad != hw:
        # TODO(synk): handle the ragged pixel tail in-kernel (masked last tile)
        # instead of a wrapper pad + output slice.
        x2d = jnp.pad(x2d, ((0, 0), (0, hw_pad - hw)))

    blk_rows = imgs_per_step * c_in
    grid = (n // imgs_per_step, hw_pad // hw_tile)

    x_spec = pl.BlockSpec((blk_rows, hw_tile), lambda i, j: (i, j))
    out_spec = pl.BlockSpec((blk_rows, hw_tile), lambda i, j: (i, j))

    def full_spec(a):            # constant-index full block: DMA'd once, resident
        nd = a.ndim
        return pl.BlockSpec(a.shape, lambda i, j, _nd=nd: (0,) * _nd)

    in_specs = [x_spec] + [full_spec(a) for a in ops]

    # VMEM estimate: double-buffered in/out tiles, f32 + casted intermediates
    # for every packed image, and the double-buffered weight/shift blocks
    # (shift columns pad to (co,128) tiles).
    io_bytes = 2 * blk_rows * hw_tile * (x2d.dtype.itemsize
                                         + jnp.dtype(out_dtype).itemsize)
    inter_bytes = imgs_per_step * hw_tile * 2 * (h1c + h2c) * (4 + cdt.itemsize)
    w_bytes = 2 * sum(a.size * a.dtype.itemsize for a in ops[0::2])
    t_bytes = 2 * sum(pl.cdiv(a.shape[0], 8) * 8 * 128 * 4 for a in ops[1::2])
    est_vmem = io_bytes + inter_bytes + w_bytes + t_bytes

    # Always set the scoped-VMEM limit (v5e's default is only 16 MiB); cap it
    # from the hardware's VMEM capacity (safe on v7x's 64 MiB per TensorCore).
    try:
        cap = int(pltpu.get_tpu_info().vmem_capacity_bytes) * 5 // 8
    except Exception:  # pragma: no cover - defensive fallback
        cap = 40 << 20
    cap = min(cap, 40 << 20)
    vmem_limit = int(max(32 << 20, min(est_vmem + (4 << 20), cap)))

    out = pl.pallas_call(
        functools.partial(_featcae_kernel,
                          imgs_per_step=imgs_per_step, c_in=c_in),
        out_shape=jax.ShapeDtypeStruct((n * c_in, hw_pad), out_dtype),
        grid=grid,
        in_specs=in_specs,
        out_specs=out_spec,
        compiler_params=pltpu.CompilerParams(
            dimension_semantics=("parallel", "parallel"),
            vmem_limit_bytes=vmem_limit),
    )(x2d, *ops)

    if hw_pad != hw:
        out = out[:, :hw]
    return out.reshape(n, c_in, h, w)


def make_params(key, in_channels, latent_dim):
    """Deterministic synthetic params (conv weights/biases + folded BN)."""
    h1 = (in_channels + 2 * latent_dim) // 2
    h2 = 2 * latent_dim
    dims = [
        (in_channels, h1),   # enc conv1 (+BN, ReLU)
        (h1, h2),            # enc conv2 (+BN, ReLU)
        (h2, latent_dim),    # enc conv3
        (latent_dim, h2),    # dec conv1 (+BN, ReLU)
        (h2, h1),            # dec conv2 (+BN, ReLU)
        (h1, in_channels),   # dec conv3
    ]
    keys = jax.random.split(key, 6 * 6)
    layers = []
    ki = 0
    for li, (ci, co) in enumerate(dims):
        bound = 1.0 / jnp.sqrt(ci)
        wgt = jax.random.uniform(keys[ki], (ci, co), jnp.float32, -bound, bound); ki += 1
        bias = jax.random.uniform(keys[ki], (co,), jnp.float32, -bound, bound); ki += 1
        has_bn = li not in (2, 5)
        if has_bn:
            gamma = 1.0 + 0.1 * jax.random.normal(keys[ki], (co,), jnp.float32); ki += 1
            beta = 0.1 * jax.random.normal(keys[ki], (co,), jnp.float32); ki += 1
            mean = 0.05 * jax.random.normal(keys[ki], (co,), jnp.float32); ki += 1
            var = 1.0 + 0.1 * jax.random.uniform(keys[ki], (co,), jnp.float32); ki += 1
            scale, shift = _fold_bn(bias, gamma, beta, mean, var)
            layers.append((wgt, scale, shift))
        else:
            ki += 4
            layers.append((wgt, bias))
    return tuple(layers)


def featcae_reference(x_nchw, layers):
    """Pure-JAX reference with the original (unfused) layer structure."""
    n, c, h, w = x_nchw.shape
    x = jnp.transpose(x_nchw, (0, 2, 3, 1)).reshape(-1, c)
    (w1, s1, t1), (w2, s2, t2), (w3, b3), (w4, s4, t4), (w5, s5, t5), (w6, b6) = layers
    x = jnp.maximum(x @ w1 * s1 + t1, 0.0)
    x = jnp.maximum(x @ w2 * s2 + t2, 0.0)
    x = x @ w3 + b3
    x = jnp.maximum(x @ w4 * s4 + t4, 0.0)
    x = jnp.maximum(x @ w5 * s5 + t5, 0.0)
    x = x @ w6 + b6
    return jnp.transpose(x.reshape(n, h, w, c), (0, 3, 1, 2))


if __name__ == "__main__":
    # Small shapes consistent with a ResNet-feature autoencoder:
    # in_channels=64, latent_dim=16 -> hidden dims 48 / 32.
    N, C_IN, H, W = 4, 64, 16, 16
    LATENT = 16

    key = jax.random.PRNGKey(0)
    kx, kp = jax.random.split(key)
    x = jax.random.normal(kx, (N, C_IN, H, W), jnp.float32)
    layers = make_params(kp, C_IN, LATENT)

    y_ref = featcae_reference(x, layers)

    # f32 MXU operands: tight check against the unfused reference.
    fwd_f32 = jax.jit(functools.partial(featcae_forward,
                                        compute_dtype=jnp.float32))
    y_f32 = fwd_f32(x, layers)
    jax.block_until_ready(y_f32)
    assert y_f32.shape == (N, C_IN, H, W)
    assert jnp.allclose(y_f32, y_ref, atol=3e-4, rtol=3e-4), "f32 mismatch"

    # bf16 MXU operands (default perf path on all generations): accuracy is
    # bf16-limited, so compare with a loose tolerance.
    fwd_bf16 = jax.jit(featcae_forward)
    y_bf16 = fwd_bf16(x, layers)
    jax.block_until_ready(y_bf16)
    assert y_bf16.shape == (N, C_IN, H, W)
    assert jnp.allclose(y_bf16, y_ref, atol=2e-1, rtol=2e-1), "bf16 mismatch"

    print("KERNEL_OK")
</pallas_src>

<mosaic_0001>
module attributes {stable_mosaic.version = 11 : i64} {
  func.func @_featcae_kernel(%arg0: i32, %arg1: i32, %arg2: memref<128x256xf32, #tpu.memory_space<vmem>>, %arg3: memref<48x64xf32, #tpu.memory_space<vmem>>, %arg4: memref<48x1xf32, #tpu.memory_space<vmem>>, %arg5: memref<32x48xf32, #tpu.memory_space<vmem>>, %arg6: memref<32x1xf32, #tpu.memory_space<vmem>>, %arg7: memref<32x32xf32, #tpu.memory_space<vmem>>, %arg8: memref<32x1xf32, #tpu.memory_space<vmem>>, %arg9: memref<48x32xf32, #tpu.memory_space<vmem>>, %arg10: memref<48x1xf32, #tpu.memory_space<vmem>>, %arg11: memref<64x48xf32, #tpu.memory_space<vmem>>, %arg12: memref<64x1xf32, #tpu.memory_space<vmem>>, %arg13: memref<128x256xf32, #tpu.memory_space<vmem>>) attributes {dimension_semantics = [#tpu.dimension_semantics<parallel>, #tpu.dimension_semantics<parallel>], iteration_bounds = array<i64: 2, 1>, scalar_prefetch = 0 : i64, scratch_operands = 0 : i64, tpu.core_type = #tpu.core_type<tc>, window_params = [{transform_indices = @transform_0, window_bounds = array<i64: 128, 256>}, {pipeline_mode = #tpu.pipeline_mode<synchronous>, transform_indices = @transform_1, window_bounds = array<i64: 48, 64>}, {pipeline_mode = #tpu.pipeline_mode<synchronous>, transform_indices = @transform_2, window_bounds = array<i64: 48, 1>}, {pipeline_mode = #tpu.pipeline_mode<synchronous>, transform_indices = @transform_3, window_bounds = array<i64: 32, 48>}, {pipeline_mode = #tpu.pipeline_mode<synchronous>, transform_indices = @transform_4, window_bounds = array<i64: 32, 1>}, {pipeline_mode = #tpu.pipeline_mode<synchronous>, transform_indices = @transform_5, window_bounds = array<i64: 32, 32>}, {pipeline_mode = #tpu.pipeline_mode<synchronous>, transform_indices = @transform_6, window_bounds = array<i64: 32, 1>}, {pipeline_mode = #tpu.pipeline_mode<synchronous>, transform_indices = @transform_7, window_bounds = array<i64: 48, 32>}, {pipeline_mode = #tpu.pipeline_mode<synchronous>, transform_indices = @transform_8, window_bounds = array<i64: 48, 1>}, {pipeline_mode = #tpu.pipeline_mode<synchronous>, transform_indices = @transform_9, window_bounds = array<i64: 64, 48>}, {pipeline_mode = #tpu.pipeline_mode<synchronous>, transform_indices = @transform_10, window_bounds = array<i64: 64, 1>}, {transform_indices = @transform_11, window_bounds = array<i64: 128, 256>}]} {
    %c0 = arith.constant 0 : index
    %c0_0 = arith.constant 0 : index
    %0 = vector.load %arg2[%c0, %c0_0] : memref<128x256xf32, #tpu.memory_space<vmem>>, vector<64x256xf32>
    %c0_1 = arith.constant 0 : index
    %c0_2 = arith.constant 0 : index
    %1 = vector.load %arg3[%c0_1, %c0_2] : memref<48x64xf32, #tpu.memory_space<vmem>>, vector<48x64xf32>
    %cst = arith.constant dense<0.000000e+00> : vector<48x256xf32>
    %2 = tpu.matmul %1, %0, %cst {dimension_numbers = #tpu.dot_dimension_numbers<[1], [0], [0], [1], [0, 0, 1, 1], [], []>} : vector<48x64xf32>, vector<64x256xf32>, vector<48x256xf32> -> vector<48x256xf32>
    %c0_3 = arith.constant 0 : index
    %c0_4 = arith.constant 0 : index
    %3 = vector.load %arg4[%c0_3, %c0_4] : memref<48x1xf32, #tpu.memory_space<vmem>>, vector<48x1xf32>
    %4 = vector.broadcast %3 : vector<48x1xf32> to vector<48x256xf32>
    %5 = arith.addf %2, %4 : vector<48x256xf32>
    %cst_5 = arith.constant 0.000000e+00 : f32
    %6 = vector.broadcast %cst_5 : f32 to vector<48x256xf32>
    %7 = arith.maximumf %5, %6 : vector<48x256xf32>
    %c0_6 = arith.constant 0 : index
    %c0_7 = arith.constant 0 : index
    %8 = vector.load %arg5[%c0_6, %c0_7] : memref<32x48xf32, #tpu.memory_space<vmem>>, vector<32x48xf32>
    %cst_8 = arith.constant dense<0.000000e+00> : vector<32x256xf32>
    %9 = tpu.matmul %8, %7, %cst_8 {dimension_numbers = #tpu.dot_dimension_numbers<[1], [0], [0], [1], [0, 0, 1, 1], [], []>} : vector<32x48xf32>, vector<48x256xf32>, vector<32x256xf32> -> vector<32x256xf32>
    %c0_9 = arith.constant 0 : index
    %c0_10 = arith.constant 0 : index
    %10 = vector.load %arg6[%c0_9, %c0_10] : memref<32x1xf32, #tpu.memory_space<vmem>>, vector<32x1xf32>
    %11 = vector.broadcast %10 : vector<32x1xf32> to vector<32x256xf32>
    %12 = arith.addf %9, %11 : vector<32x256xf32>
    %cst_11 = arith.constant 0.000000e+00 : f32
    %13 = vector.broadcast %cst_11 : f32 to vector<32x256xf32>
    %14 = arith.maximumf %12, %13 : vector<32x256xf32>
    %c0_12 = arith.constant 0 : index
    %c0_13 = arith.constant 0 : index
    %15 = vector.load %arg7[%c0_12, %c0_13] : memref<32x32xf32, #tpu.memory_space<vmem>>, vector<32x32xf32>
    %cst_14 = arith.constant dense<0.000000e+00> : vector<32x256xf32>
    %16 = tpu.matmul %15, %14, %cst_14 {dimension_numbers = #tpu.dot_dimension_numbers<[1], [0], [0], [1], [0, 0, 1, 1], [], []>} : vector<32x32xf32>, vector<32x256xf32>, vector<32x256xf32> -> vector<32x256xf32>
    %c0_15 = arith.constant 0 : index
    %c0_16 = arith.constant 0 : index
    %17 = vector.load %arg8[%c0_15, %c0_16] : memref<32x1xf32, #tpu.memory_space<vmem>>, vector<32x1xf32>
    %18 = vector.broadcast %17 : vector<32x1xf32> to vector<32x256xf32>
    %19 = arith.addf %16, %18 : vector<32x256xf32>
    %cst_17 = arith.constant 0.000000e+00 : f32
    %20 = vector.broadcast %cst_17 : f32 to vector<32x256xf32>
    %21 = arith.maximumf %19, %20 : vector<32x256xf32>
    %c0_18 = arith.constant 0 : index
    %c0_19 = arith.constant 0 : index
    %22 = vector.load %arg9[%c0_18, %c0_19] : memref<48x32xf32, #tpu.memory_space<vmem>>, vector<48x32xf32>
    %cst_20 = arith.constant dense<0.000000e+00> : vector<48x256xf32>
    %23 = tpu.matmul %22, %21, %cst_20 {dimension_numbers = #tpu.dot_dimension_numbers<[1], [0], [0], [1], [0, 0, 1, 1], [], []>} : vector<48x32xf32>, vector<32x256xf32>, vector<48x256xf32> -> vector<48x256xf32>
    %c0_21 = arith.constant 0 : index
    %c0_22 = arith.constant 0 : index
    %24 = vector.load %arg10[%c0_21, %c0_22] : memref<48x1xf32, #tpu.memory_space<vmem>>, vector<48x1xf32>
    %25 = vector.broadcast %24 : vector<48x1xf32> to vector<48x256xf32>
    %26 = arith.addf %23, %25 : vector<48x256xf32>
    %cst_23 = arith.constant 0.000000e+00 : f32
    %27 = vector.broadcast %cst_23 : f32 to vector<48x256xf32>
    %28 = arith.maximumf %26, %27 : vector<48x256xf32>
    %c0_24 = arith.constant 0 : index
    %c0_25 = arith.constant 0 : index
    %29 = vector.load %arg11[%c0_24, %c0_25] : memref<64x48xf32, #tpu.memory_space<vmem>>, vector<64x48xf32>
    %cst_26 = arith.constant dense<0.000000e+00> : vector<64x256xf32>
    %30 = tpu.matmul %29, %28, %cst_26 {dimension_numbers = #tpu.dot_dimension_numbers<[1], [0], [0], [1], [0, 0, 1, 1], [], []>} : vector<64x48xf32>, vector<48x256xf32>, vector<64x256xf32> -> vector<64x256xf32>
    %c0_27 = arith.constant 0 : index
    %c0_28 = arith.constant 0 : index
    %31 = vector.load %arg12[%c0_27, %c0_28] : memref<64x1xf32, #tpu.memory_space<vmem>>, vector<64x1xf32>
    %32 = vector.broadcast %31 : vector<64x1xf32> to vector<64x256xf32>
    %33 = arith.addf %30, %32 : vector<64x256xf32>
    %c0_29 = arith.constant 0 : index
    %c0_30 = arith.constant 0 : index
    %34 = vector.load %arg13[%c0_29, %c0_30] : memref<128x256xf32, #tpu.memory_space<vmem>>, vector<64x256xf32>
    tpu.vector_store %arg13[%c0_29, %c0_30], %33 {strides = array<i32>} : memref<128x256xf32, #tpu.memory_space<vmem>>, vector<64x256xf32>,
    %c64 = arith.constant 64 : index
    %c0_31 = arith.constant 0 : index
    %35 = vector.load %arg2[%c64, %c0_31] : memref<128x256xf32, #tpu.memory_space<vmem>>, vector<64x256xf32>
    %c0_32 = arith.constant 0 : index
    %c0_33 = arith.constant 0 : index
    %36 = vector.load %arg3[%c0_32, %c0_33] : memref<48x64xf32, #tpu.memory_space<vmem>>, vector<48x64xf32>
    %cst_34 = arith.constant dense<0.000000e+00> : vector<48x256xf32>
    %37 = tpu.matmul %36, %35, %cst_34 {dimension_numbers = #tpu.dot_dimension_numbers<[1], [0], [0], [1], [0, 0, 1, 1], [], []>} : vector<48x64xf32>, vector<64x256xf32>, vector<48x256xf32> -> vector<48x256xf32>
    %c0_35 = arith.constant 0 : index
    %c0_36 = arith.constant 0 : index
    %38 = vector.load %arg4[%c0_35, %c0_36] : memref<48x1xf32, #tpu.memory_space<vmem>>, vector<48x1xf32>
    %39 = vector.broadcast %38 : vector<48x1xf32> to vector<48x256xf32>
    %40 = arith.addf %37, %39 : vector<48x256xf32>
    %cst_37 = arith.constant 0.000000e+00 : f32
    %41 = vector.broadcast %cst_37 : f32 to vector<48x256xf32>
    %42 = arith.maximumf %40, %41 : vector<48x256xf32>
    %c0_38 = arith.constant 0 : index
    %c0_39 = arith.constant 0 : index
    %43 = vector.load %arg5[%c0_38, %c0_39] : memref<32x48xf32, #tpu.memory_space<vmem>>, vector<32x48xf32>
    %cst_40 = arith.constant dense<0.000000e+00> : vector<32x256xf32>
    %44 = tpu.matmul %43, %42, %cst_40 {dimension_numbers = #tpu.dot_dimension_numbers<[1], [0], [0], [1], [0, 0, 1, 1], [], []>} : vector<32x48xf32>, vector<48x256xf32>, vector<32x256xf32> -> vector<32x256xf32>
    %c0_41 = arith.constant 0 : index
    %c0_42 = arith.constant 0 : index
    %45 = vector.load %arg6[%c0_41, %c0_42] : memref<32x1xf32, #tpu.memory_space<vmem>>, vector<32x1xf32>
    %46 = vector.broadcast %45 : vector<32x1xf32> to vector<32x256xf32>
    %47 = arith.addf %44, %46 : vector<32x256xf32>
    %cst_43 = arith.constant 0.000000e+00 : f32
    %48 = vector.broadcast %cst_43 : f32 to vector<32x256xf32>
    %49 = arith.maximumf %47, %48 : vector<32x256xf32>
    %c0_44 = arith.constant 0 : index
    %c0_45 = arith.constant 0 : index
    %50 = vector.load %arg7[%c0_44, %c0_45] : memref<32x32xf32, #tpu.memory_space<vmem>>, vector<32x32xf32>
    %cst_46 = arith.constant dense<0.000000e+00> : vector<32x256xf32>
    %51 = tpu.matmul %50, %49, %cst_46 {dimension_numbers = #tpu.dot_dimension_numbers<[1], [0], [0], [1], [0, 0, 1, 1], [], []>} : vector<32x32xf32>, vector<32x256xf32>, vector<32x256xf32> -> vector<32x256xf32>
    %c0_47 = arith.constant 0 : index
    %c0_48 = arith.constant 0 : index
    %52 = vector.load %arg8[%c0_47, %c0_48] : memref<32x1xf32, #tpu.memory_space<vmem>>, vector<32x1xf32>
    %53 = vector.broadcast %52 : vector<32x1xf32> to vector<32x256xf32>
    %54 = arith.addf %51, %53 : vector<32x256xf32>
    %cst_49 = arith.constant 0.000000e+00 : f32
    %55 = vector.broadcast %cst_49 : f32 to vector<32x256xf32>
    %56 = arith.maximumf %54, %55 : vector<32x256xf32>
    %c0_50 = arith.constant 0 : index
    %c0_51 = arith.constant 0 : index
    %57 = vector.load %arg9[%c0_50, %c0_51] : memref<48x32xf32, #tpu.memory_space<vmem>>, vector<48x32xf32>
    %cst_52 = arith.constant dense<0.000000e+00> : vector<48x256xf32>
    %58 = tpu.matmul %57, %56, %cst_52 {dimension_numbers = #tpu.dot_dimension_numbers<[1], [0], [0], [1], [0, 0, 1, 1], [], []>} : vector<48x32xf32>, vector<32x256xf32>, vector<48x256xf32> -> vector<48x256xf32>
    %c0_53 = arith.constant 0 : index
    %c0_54 = arith.constant 0 : index
    %59 = vector.load %arg10[%c0_53, %c0_54] : memref<48x1xf32, #tpu.memory_space<vmem>>, vector<48x1xf32>
    %60 = vector.broadcast %59 : vector<48x1xf32> to vector<48x256xf32>
    %61 = arith.addf %58, %60 : vector<48x256xf32>
    %cst_55 = arith.constant 0.000000e+00 : f32
    %62 = vector.broadcast %cst_55 : f32 to vector<48x256xf32>
    %63 = arith.maximumf %61, %62 : vector<48x256xf32>
    %c0_56 = arith.constant 0 : index
    %c0_57 = arith.constant 0 : index
    %64 = vector.load %arg11[%c0_56, %c0_57] : memref<64x48xf32, #tpu.memory_space<vmem>>, vector<64x48xf32>
    %cst_58 = arith.constant dense<0.000000e+00> : vector<64x256xf32>
    %65 = tpu.matmul %64, %63, %cst_58 {dimension_numbers = #tpu.dot_dimension_numbers<[1], [0], [0], [1], [0, 0, 1, 1], [], []>} : vector<64x48xf32>, vector<48x256xf32>, vector<64x256xf32> -> vector<64x256xf32>
    %c0_59 = arith.constant 0 : index
    %c0_60 = arith.constant 0 : index
    %66 = vector.load %arg12[%c0_59, %c0_60] : memref<64x1xf32, #tpu.memory_space<vmem>>, vector<64x1xf32>
    %67 = vector.broadcast %66 : vector<64x1xf32> to vector<64x256xf32>
    %68 = arith.addf %65, %67 : vector<64x256xf32>
    %c64_61 = arith.constant 64 : index
    %c0_62 = arith.constant 0 : index
    %69 = vector.load %arg13[%c64_61, %c0_62] : memref<128x256xf32, #tpu.memory_space<vmem>>, vector<64x256xf32>
    tpu.vector_store %arg13[%c64_61, %c0_62], %68 {strides = array<i32>} : memref<128x256xf32, #tpu.memory_space<vmem>>, vector<64x256xf32>,
    return
  }
  func.func @transform_0(%arg0: i32, %arg1: i32) -> (i32, i32) {
    %c0_i32 = arith.constant 0 : i32
    return %arg0, %arg1 : i32, i32
  }
  func.func @transform_1(%arg0: i32, %arg1: i32) -> (i32, i32) {
    %c0_i32 = arith.constant 0 : i32
    %c0_i32_0 = arith.constant 0 : i32
    %c0_i32_1 = arith.constant 0 : i32
    return %c0_i32, %c0_i32_0 : i32, i32
  }
  func.func @transform_2(%arg0: i32, %arg1: i32) -> (i32, i32) {
    %c0_i32 = arith.constant 0 : i32
    %c0_i32_0 = arith.constant 0 : i32
    %c0_i32_1 = arith.constant 0 : i32
    return %c0_i32, %c0_i32_0 : i32, i32
  }
  func.func @transform_3(%arg0: i32, %arg1: i32) -> (i32, i32) {
    %c0_i32 = arith.constant 0 : i32
    %c0_i32_0 = arith.constant 0 : i32
    %c0_i32_1 = arith.constant 0 : i32
    return %c0_i32, %c0_i32_0 : i32, i32
  }
  func.func @transform_4(%arg0: i32, %arg1: i32) -> (i32, i32) {
    %c0_i32 = arith.constant 0 : i32
    %c0_i32_0 = arith.constant 0 : i32
    %c0_i32_1 = arith.constant 0 : i32
    return %c0_i32, %c0_i32_0 : i32, i32
  }
  func.func @transform_5(%arg0: i32, %arg1: i32) -> (i32, i32) {
    %c0_i32 = arith.constant 0 : i32
    %c0_i32_0 = arith.constant 0 : i32
    %c0_i32_1 = arith.constant 0 : i32
    return %c0_i32, %c0_i32_0 : i32, i32
  }
  func.func @transform_6(%arg0: i32, %arg1: i32) -> (i32, i32) {
    %c0_i32 = arith.constant 0 : i32
    %c0_i32_0 = arith.constant 0 : i32
    %c0_i32_1 = arith.constant 0 : i32
    return %c0_i32, %c0_i32_0 : i32, i32
  }
  func.func @transform_7(%arg0: i32, %arg1: i32) -> (i32, i32) {
    %c0_i32 = arith.constant 0 : i32
    %c0_i32_0 = arith.constant 0 : i32
    %c0_i32_1 = arith.constant 0 : i32
    return %c0_i32, %c0_i32_0 : i32, i32
  }
  func.func @transform_8(%arg0: i32, %arg1: i32) -> (i32, i32) {
    %c0_i32 = arith.constant 0 : i32
    %c0_i32_0 = arith.constant 0 : i32
    %c0_i32_1 = arith.constant 0 : i32
    return %c0_i32, %c0_i32_0 : i32, i32
  }
  func.func @transform_9(%arg0: i32, %arg1: i32) -> (i32, i32) {
    %c0_i32 = arith.constant 0 : i32
    %c0_i32_0 = arith.constant 0 : i32
    %c0_i32_1 = arith.constant 0 : i32
    return %c0_i32, %c0_i32_0 : i32, i32
  }
  func.func @transform_10(%arg0: i32, %arg1: i32) -> (i32, i32) {
    %c0_i32 = arith.constant 0 : i32
    %c0_i32_0 = arith.constant 0 : i32
    %c0_i32_1 = arith.constant 0 : i32
    return %c0_i32, %c0_i32_0 : i32, i32
  }
  func.func @transform_11(%arg0: i32, %arg1: i32) -> (i32, i32) {
    %c0_i32 = arith.constant 0 : i32
    return %arg0, %arg1 : i32, i32
  }
}

</mosaic_0001>

<llo_original>
// kernel: featcae_forward.1
$region0: #{featcae_forward.1}
  #allocation0 [shape = 'u32[]', space=smem, size = 0x4, offset = 0x4, fixed_abs, tag = 'smem constant byte address 0x4 - core index']
  #allocation1 [shape = 'u32[72,128]{1,0:T(1,128)}', space=vmem, size = 0x9000, scoped, tag = 'internal scratch']
  %s0 = inlined_call_operand.vmem [shape: f32[256,256], index: 0, kind: input, shape index: {}]
  %s1 = inlined_call_operand.vmem [shape: f32[48,64], index: 1, kind: input, shape index: {}]
  %s2 = inlined_call_operand.vmem [shape: f32[48,1], index: 2, kind: input, shape index: {}]
  %s3 = inlined_call_operand.vmem [shape: f32[32,48], index: 3, kind: input, shape index: {}]
  %s4 = inlined_call_operand.vmem [shape: f32[32,1], index: 4, kind: input, shape index: {}]
  %s5 = inlined_call_operand.vmem [shape: f32[32,32], index: 5, kind: input, shape index: {}]
  %s6 = inlined_call_operand.vmem [shape: f32[32,1], index: 6, kind: input, shape index: {}]
  %s7 = inlined_call_operand.vmem [shape: f32[48,32], index: 7, kind: input, shape index: {}]
  %s8 = inlined_call_operand.vmem [shape: f32[48,1], index: 8, kind: input, shape index: {}]
  %s9 = inlined_call_operand.vmem [shape: f32[64,48], index: 9, kind: input, shape index: {}]
  %s10 = inlined_call_operand.vmem [shape: f32[64,1], index: 10, kind: input, shape index: {}]
  %s11 = inlined_call_operand.vmem [shape: f32[256,256], index: 11, kind: output, shape index: {}]
  %s12 = sld [smem:[#allocation0]]
  $region77: #{featcae_forward.1} parent=0
    _
  %s14 = ssub.s32 1, %s12
  %s15 = scalar_select 0, %s14, %s12
  loop: start=0, step=1, limit=4
  $region2: #{featcae_forward.1} parent=0 // loop_pre_header
    _
  $region3: #{featcae_forward.1} parent=0 // loop_header
    %s17 = sphi 0, %s21
    %p18 = scmp.ge.s32.totalorder %s17, 4
    %s24 = sphi 0, %s36
    %s25 = sphi 0, %s32
    %s26 = sphi 0, %s24
    %s27 = sphi 0, %s25
    %s28 = sphi 0, %s26
    %s29 = sphi 0, %s27
    %s41 = sphi 0, %s43
    %s44 = sphi 0, %s41
    %s45 = sphi 0, %s44
    %s61 = sphi 0, %s45
    %s65 = sphi 0, %s65
    %s67 = sphi 0, %s65
    %s68 = sphi 0, %s67
    %s82 = sphi 0, %s68
    %s86 = sphi 0, %s86
    %s88 = sphi 0, %s86
    %s89 = sphi 0, %s88
    %s103 = sphi 0, %s89
    %s107 = sphi 0, %s107
    %s109 = sphi 0, %s107
    %s110 = sphi 0, %s109
    %s124 = sphi 0, %s110
    %s128 = sphi 0, %s128
    %s130 = sphi 0, %s128
    %s131 = sphi 0, %s130
    %s145 = sphi 0, %s131
    %s149 = sphi 0, %s149
    %s151 = sphi 0, %s149
    %s152 = sphi 0, %s151
    %s166 = sphi 0, %s152
    %s170 = sphi 0, %s170
    %s172 = sphi 0, %s170
    %s173 = sphi 0, %s172
    %s187 = sphi 0, %s173
    %s191 = sphi 0, %s191
    %s193 = sphi 0, %s191
    %s194 = sphi 0, %s193
    %s208 = sphi 0, %s194
    %s212 = sphi 0, %s212
    %s214 = sphi 0, %s212
    %s215 = sphi 0, %s214
    %s229 = sphi 0, %s215
    %s233 = sphi 0, %s233
    %s235 = sphi 0, %s233
    %s236 = sphi 0, %s235
    %s250 = sphi 0, %s236
    %s254 = sphi 0, %s254
    %s256 = sphi 0, %s254
    %s257 = sphi 0, %s256
    %s271 = sphi 0, %s257
    %s279 = sphi 0, %s281
    %s282 = sphi 0, %s279
    %s283 = sphi 0, %s282
    %s299 = sphi 0, %s283
  $region4: #{featcae_forward.1} parent=0 // loop_header_branch
    %20 = sbr.rel (%p18) target = $region8
  $region5: #{featcae_forward.1} parent=0 // loop_body
    %s22 = ssub.s32 %s17, 1
    %s23 = ssub.s32 %s17, 2
    %s30 = sadd.s32 1, %s25
    %p31 = scmp.ge.s32.totalorder %s30, 1
    %s32 = scalar_select %p31, 0, %s30
    %s33 = sadd.s32 1, %s24
    %s34 = scalar_select %p31, %s33, %s24
    %p35 = scmp.ge.s32.totalorder %s34, 2
    %s36 = scalar_select %p35, 0, %s34
    %s37 = ssub.s32 %s24, %s36
    %s38 = ssub.s32 %s25, %s32
    %s39 = sor.u32 %s37, %s38
    %p40 = scmp.eq.s32.totalorder %s39, 0
    %s42 = sadd.s32 %s41, 1
    %s43 = scalar_select %p40, %s41, %s42
    %p46 = pneg %p40
    %p47 = scmp.eq.s32.totalorder %s17, 1
    %p48 = por %p46, %p47
    %p49 = scmp.ne.s32.totalorder %s41, %s44
    %p50 = scmp.eq.s32.totalorder %s17, 0
    %p51 = por %p49, %p50
    %p52 = scmp.ne.s32.totalorder %s41, %s44
    %p53 = scmp.eq.s32.totalorder %s22, 1
    %p54 = por %p52, %p53
    %p55 = scmp.ne.s32.totalorder %s44, %s45
    %p56 = scmp.eq.s32.totalorder %s22, 0
    %p57 = por %p55, %p56
    %p58 = scmp.ne.s32.totalorder %s44, %s45
    %p59 = scmp.eq.s32.totalorder %s23, 1
    %p60 = por %p58, %p59
    %p62 = scmp.ne.s32.totalorder %s45, %s61
    %p63 = scmp.eq.s32.totalorder %s23, 0
    %p64 = por %p62, %p63
    %s66 = sadd.s32 %s65, 1
    %p69 = scmp.eq.s32.totalorder %s17, 1
    %p70 = scmp.ne.s32.totalorder %s65, %s67
    %p71 = scmp.eq.s32.totalorder %s17, 0
    %p72 = por %p70, %p71
    %p73 = scmp.ne.s32.totalorder %s65, %s67
    %p74 = scmp.eq.s32.totalorder %s22, 1
    %p75 = por %p73, %p74
    %p76 = scmp.ne.s32.totalorder %s67, %s68
    %p77 = scmp.eq.s32.totalorder %s22, 0
    %p78 = por %p76, %p77
    %p79 = scmp.ne.s32.totalorder %s67, %s68
    %p80 = scmp.eq.s32.totalorder %s23, 1
    %p81 = por %p79, %p80
    %p83 = scmp.ne.s32.totalorder %s68, %s82
    %p84 = scmp.eq.s32.totalorder %s23, 0
    %p85 = por %p83, %p84
    %s87 = sadd.s32 %s86, 1
    %p90 = scmp.eq.s32.totalorder %s17, 1
    %p91 = scmp.ne.s32.totalorder %s86, %s88
    %p92 = scmp.eq.s32.totalorder %s17, 0
    %p93 = por %p91, %p92
    %p94 = scmp.ne.s32.totalorder %s86, %s88
    %p95 = scmp.eq.s32.totalorder %s22, 1
    %p96 = por %p94, %p95
    %p97 = scmp.ne.s32.totalorder %s88, %s89
    %p98 = scmp.eq.s32.totalorder %s22, 0
    %p99 = por %p97, %p98
    %p100 = scmp.ne.s32.totalorder %s88, %s89
    %p101 = scmp.eq.s32.totalorder %s23, 1
    %p102 = por %p100, %p101
    %p104 = scmp.ne.s32.totalorder %s89, %s103
    %p105 = scmp.eq.s32.totalorder %s23, 0
    %p106 = por %p104, %p105
    %s108 = sadd.s32 %s107, 1
    %p111 = scmp.eq.s32.totalorder %s17, 1
    %p112 = scmp.ne.s32.totalorder %s107, %s109
    %p113 = scmp.eq.s32.totalorder %s17, 0
    %p114 = por %p112, %p113
    %p115 = scmp.ne.s32.totalorder %s107, %s109
    %p116 = scmp.eq.s32.totalorder %s22, 1
    %p117 = por %p115, %p116
    %p118 = scmp.ne.s32.totalorder %s109, %s110
    %p119 = scmp.eq.s32.totalorder %s22, 0
    %p120 = por %p118, %p119
    %p121 = scmp.ne.s32.totalorder %s109, %s110
    %p122 = scmp.eq.s32.totalorder %s23, 1
    %p123 = por %p121, %p122
    %p125 = scmp.ne.s32.totalorder %s110, %s124
    %p126 = scmp.eq.s32.totalorder %s23, 0
    %p127 = por %p125, %p126
    %s129 = sadd.s32 %s128, 1
    %p132 = scmp.eq.s32.totalorder %s17, 1
    %p133 = scmp.ne.s32.totalorder %s128, %s130
    %p134 = scmp.eq.s32.totalorder %s17, 0
    %p135 = por %p133, %p134
    %p136 = scmp.ne.s32.totalorder %s128, %s130
    %p137 = scmp.eq.s32.totalorder %s22, 1
    %p138 = por %p136, %p137
    %p139 = scmp.ne.s32.totalorder %s130, %s131
    %p140 = scmp.eq.s32.totalorder %s22, 0
    %p141 = por %p139, %p140
    %p142 = scmp.ne.s32.totalorder %s130, %s131
    %p143 = scmp.eq.s32.totalorder %s23, 1
    %p144 = por %p142, %p143
    %p146 = scmp.ne.s32.totalorder %s131, %s145
    %p147 = scmp.eq.s32.totalorder %s23, 0
    %p148 = por %p146, %p147
    %s150 = sadd.s32 %s149, 1
    %p153 = scmp.eq.s32.totalorder %s17, 1
    %p154 = scmp.ne.s32.totalorder %s149, %s151
    %p155 = scmp.eq.s32.totalorder %s17, 0
    %p156 = por %p154, %p155
    %p157 = scmp.ne.s32.totalorder %s149, %s151
    %p158 = scmp.eq.s32.totalorder %s22, 1
    %p159 = por %p157, %p158
    %p160 = scmp.ne.s32.totalorder %s151, %s152
    %p161 = scmp.eq.s32.totalorder %s22, 0
    %p162 = por %p160, %p161
    %p163 = scmp.ne.s32.totalorder %s151, %s152
    %p164 = scmp.eq.s32.totalorder %s23, 1
    %p165 = por %p163, %p164
    %p167 = scmp.ne.s32.totalorder %s152, %s166
    %p168 = scmp.eq.s32.totalorder %s23, 0
    %p169 = por %p167, %p168
    %s171 = sadd.s32 %s170, 1
    %p174 = scmp.eq.s32.totalorder %s17, 1
    %p175 = scmp.ne.s32.totalorder %s170, %s172
    %p176 = scmp.eq.s32.totalorder %s17, 0
    %p177 = por %p175, %p176
    %p178 = scmp.ne.s32.totalorder %s170, %s172
    %p179 = scmp.eq.s32.totalorder %s22, 1
    %p180 = por %p178, %p179
    %p181 = scmp.ne.s32.totalorder %s172, %s173
    %p182 = scmp.eq.s32.totalorder %s22, 0
    %p183 = por %p181, %p182
    %p184 = scmp.ne.s32.totalorder %s172, %s173
    %p185 = scmp.eq.s32.totalorder %s23, 1
    %p186 = por %p184, %p185
    %p188 = scmp.ne.s32.totalorder %s173, %s187
    %p189 = scmp.eq.s32.totalorder %s23, 0
    %p190 = por %p188, %p189
    %s192 = sadd.s32 %s191, 1
    %p195 = scmp.eq.s32.totalorder %s17, 1
    %p196 = scmp.ne.s32.totalorder %s191, %s193
    %p197 = scmp.eq.s32.totalorder %s17, 0
    %p198 = por %p196, %p197
    %p199 = scmp.ne.s32.totalorder %s191, %s193
    %p200 = scmp.eq.s32.totalorder %s22, 1
    %p201 = por %p199, %p200
    %p202 = scmp.ne.s32.totalorder %s193, %s194
    %p203 = scmp.eq.s32.totalorder %s22, 0
    %p204 = por %p202, %p203
    %p205 = scmp.ne.s32.totalorder %s193, %s194
    %p206 = scmp.eq.s32.totalorder %s23, 1
    %p207 = por %p205, %p206
    %p209 = scmp.ne.s32.totalorder %s194, %s208
    %p210 = scmp.eq.s32.totalorder %s23, 0
    %p211 = por %p209, %p210
    %s213 = sadd.s32 %s212, 1
    %p216 = scmp.eq.s32.totalorder %s17, 1
    %p217 = scmp.ne.s32.totalorder %s212, %s214
    %p218 = scmp.eq.s32.totalorder %s17, 0
    %p219 = por %p217, %p218
    %p220 = scmp.ne.s32.totalorder %s212, %s214
    %p221 = scmp.eq.s32.totalorder %s22, 1
    %p222 = por %p220, %p221
    %p223 = scmp.ne.s32.totalorder %s214, %s215
    %p224 = scmp.eq.s32.totalorder %s22, 0
    %p225 = por %p223, %p224
    %p226 = scmp.ne.s32.totalorder %s214, %s215
    %p227 = scmp.eq.s32.totalorder %s23, 1
    %p228 = por %p226, %p227
    %p230 = scmp.ne.s32.totalorder %s215, %s229
    %p231 = scmp.eq.s32.totalorder %s23, 0
    %p232 = por %p230, %p231
    %s234 = sadd.s32 %s233, 1
    %p237 = scmp.eq.s32.totalorder %s17, 1
    %p238 = scmp.ne.s32.totalorder %s233, %s235
    %p239 = scmp.eq.s32.totalorder %s17, 0
    %p240 = por %p238, %p239
    %p241 = scmp.ne.s32.totalorder %s233, %s235
    %p242 = scmp.eq.s32.totalorder %s22, 1
    %p243 = por %p241, %p242
    %p244 = scmp.ne.s32.totalorder %s235, %s236
    %p245 = scmp.eq.s32.totalorder %s22, 0
    %p246 = por %p244, %p245
    %p247 = scmp.ne.s32.totalorder %s235, %s236
    %p248 = scmp.eq.s32.totalorder %s23, 1
    %p249 = por %p247, %p248
    %p251 = scmp.ne.s32.totalorder %s236, %s250
    %p252 = scmp.eq.s32.totalorder %s23, 0
    %p253 = por %p251, %p252
    %s255 = sadd.s32 %s254, 1
    %p258 = scmp.eq.s32.totalorder %s17, 1
    %p259 = scmp.ne.s32.totalorder %s254, %s256
    %p260 = scmp.eq.s32.totalorder %s17, 0
    %p261 = por %p259, %p260
    %p262 = scmp.ne.s32.totalorder %s254, %s256
    %p263 = scmp.eq.s32.totalorder %s22, 1
    %p264 = por %p262, %p263
    %p265 = scmp.ne.s32.totalorder %s256, %s257
    %p266 = scmp.eq.s32.totalorder %s22, 0
    %p267 = por %p265, %p266
    %p268 = scmp.ne.s32.totalorder %s256, %s257
    %p269 = scmp.eq.s32.totalorder %s23, 1
    %p270 = por %p268, %p269
    %p272 = scmp.ne.s32.totalorder %s257, %s271
    %p273 = scmp.eq.s32.totalorder %s23, 0
    %p274 = por %p272, %p273
    %s275 = ssub.s32 %s24, %s36
    %s276 = ssub.s32 %s25, %s32
    %s277 = sor.u32 %s275, %s276
    %p278 = scmp.eq.s32.totalorder %s277, 0
    %s280 = sadd.s32 %s279, 1
    %s281 = scalar_select %p278, %s279, %s280
    %p284 = pneg %p278
    %p285 = scmp.eq.s32.totalorder %s17, 1
    %p286 = por %p284, %p285
    %p287 = scmp.ne.s32.totalorder %s279, %s282
    %p288 = scmp.eq.s32.totalorder %s17, 0
    %p289 = por %p287, %p288
    %p290 = scmp.ne.s32.totalorder %s279, %s282
    %p291 = scmp.eq.s32.totalorder %s22, 1
    %p292 = por %p290, %p291
    %p293 = scmp.ne.s32.totalorder %s282, %s283
    %p294 = scmp.eq.s32.totalorder %s22, 0
    %p295 = por %p293, %p294
    %p296 = scmp.ne.s32.totalorder %s282, %s283
    %p297 = scmp.eq.s32.totalorder %s23, 1
    %p298 = por %p296, %p297
    %p300 = scmp.ne.s32.totalorder %s283, %s299
    %p301 = scmp.eq.s32.totalorder %s23, 0
    %p302 = por %p300, %p301
    %p303 = scmp.le.s32.totalorder 1, %s17
    %p304 = scmp.lt.s32.totalorder %s17, 3
    %p305 = pnand %p303, %p304
    %p306 = pneg %p305
    // Predicated region
    $region9: #{featcae_forward.1} parent=5 // pred_check
      _
    $region10: #{featcae_forward.1} parent=5 // pred_check_branch
      %308 = sbr.rel (%p305) target = $region12
    $region11: #{featcae_forward.1} parent=5 // pred_region
      %s309 = ssub.s32 %s17, 1
      // Predicated region
      $region13: #{featcae_forward.1} parent=11 // pred_check
        %p310 = pneg %p78
      $region14: #{featcae_forward.1} parent=11 // pred_check_branch
        %312 = sbr.rel (%p310) target = $region16
      $region15: #{featcae_forward.1} parent=11 // pred_region
        _
      $region16: #{featcae_forward.1} parent=11 // pred_fallthru
        _
      // Predicated region
      $region17: #{featcae_forward.1} parent=11 // pred_check
        %p313 = pneg %p99
      $region18: #{featcae_forward.1} parent=11 // pred_check_branch
        %315 = sbr.rel (%p313) target = $region20
      $region19: #{featcae_forward.1} parent=11 // pred_region
        _
      $region20: #{featcae_forward.1} parent=11 // pred_fallthru
        _
      // Predicated region
      $region21: #{featcae_forward.1} parent=11 // pred_check
        %p316 = pneg %p120
      $region22: #{featcae_forward.1} parent=11 // pred_check_branch
        %318 = sbr.rel (%p316) target = $region24
      $region23: #{featcae_forward.1} parent=11 // pred_region
        _
      $region24: #{featcae_forward.1} parent=11 // pred_fallthru
        _
      // Predicated region
      $region25: #{featcae_forward.1} parent=11 // pred_check
        %p319 = pneg %p141
      $region26: #{featcae_forward.1} parent=11 // pred_check_branch
        %321 = sbr.rel (%p319) target = $region28
      $region27: #{featcae_forward.1} parent=11 // pred_region
        _
      $region28: #{featcae_forward.1} parent=11 // pred_fallthru
        _
      // Predicated region
      $region29: #{featcae_forward.1} parent=11 // pred_check
        %p322 = pneg %p162
      $region30: #{featcae_forward.1} parent=11 // pred_check_branch
        %324 = sbr.rel (%p322) target = $region32
      $region31: #{featcae_forward.1} parent=11 // pred_region
        _
      $region32: #{featcae_forward.1} parent=11 // pred_fallthru
        _
      // Predicated region
      $region33: #{featcae_forward.1} parent=11 // pred_check
        %p325 = pneg %p183
      $region34: #{featcae_forward.1} parent=11 // pred_check_branch
        %327 = sbr.rel (%p325) target = $region36
      $region35: #{featcae_forward.1} parent=11 // pred_region
        _
      $region36: #{featcae_forward.1} parent=11 // pred_fallthru
        _
      // Predicated region
      $region37: #{featcae_forward.1} parent=11 // pred_check
        %p328 = pneg %p204
      $region38: #{featcae_forward.1} parent=11 // pred_check_branch
        %330 = sbr.rel (%p328) target = $region40
      $region39: #{featcae_forward.1} parent=11 // pred_region
        _
      $region40: #{featcae_forward.1} parent=11 // pred_fallthru
        _
      // Predicated region
      $region41: #{featcae_forward.1} parent=11 // pred_check
        %p331 = pneg %p225
      $region42: #{featcae_forward.1} parent=11 // pred_check_branch
        %333 = sbr.rel (%p331) target = $region44
      $region43: #{featcae_forward.1} parent=11 // pred_region
        _
      $region44: #{featcae_forward.1} parent=11 // pred_fallthru
        _
      // Predicated region
      $region45: #{featcae_forward.1} parent=11 // pred_check
        %p334 = pneg %p246
      $region46: #{featcae_forward.1} parent=11 // pred_check_branch
        %336 = sbr.rel (%p334) target = $region48
      $region47: #{featcae_forward.1} parent=11 // pred_region
        _
      $region48: #{featcae_forward.1} parent=11 // pred_fallthru
        _
      // Predicated region
      $region49: #{featcae_forward.1} parent=11 // pred_check
        %p337 = pneg %p267
      $region50: #{featcae_forward.1} parent=11 // pred_check_branch
        %339 = sbr.rel (%p337) target = $region52
      $region51: #{featcae_forward.1} parent=11 // pred_region
        _
      $region52: #{featcae_forward.1} parent=11 // pred_fallthru
        _
    $region12: #{featcae_forward.1} parent=5 // pred_fallthru
      _
    %p340 = scmp.lt.s32.totalorder %s17, 2
    // Predicated region
    $region53: #{featcae_forward.1} parent=5 // pred_check
      %p341 = pneg %p340
    $region54: #{featcae_forward.1} parent=5 // pred_check_branch
      %343 = sbr.rel (%p341) target = $region56
    $region55: #{featcae_forward.1} parent=5 // pred_region
      // Predicated region
      $region57: #{featcae_forward.1} parent=55 // pred_check
        %p344 = pneg %p51
      $region58: #{featcae_forward.1} parent=55 // pred_check_branch
        %346 = sbr.rel (%p344) target = $region60
      $region59: #{featcae_forward.1} parent=55 // pred_region
        %s347 = smul.u32 16, %s24
        %s348 = smul.u32 2, %s25
        %p349 = scmp.lt.s32.totalorder %s347, 31
        %s350 = scalar_select %p349, %s347, 31
        %p351 = scmp.lt.s32.totalorder %s348, 1
        %s352 = scalar_select %p351, %s348, 1
        %s353 = smul.addr %s350, 2
        %s354 = sadd.s32 %s352, %s353
        %s355 = smul.addr %s354, 8
        %s356 = scalar_lea.vmem %s0, %s355
        %s357 = smul.u32 16, %s24
        %s358 = smul.u32 2, %s25
      $region60: #{featcae_forward.1} parent=55 // pred_fallthru
        _
    $region56: #{featcae_forward.1} parent=5 // pred_fallthru
      _
    %p359 = scmp.le.s32.totalorder 1, %s17
    %p360 = scmp.lt.s32.totalorder %s17, 3
    %p361 = pnand %p359, %p360
    %p362 = pneg %p361
    // Predicated region
    $region61: #{featcae_forward.1} parent=5 // pred_check
      _
    $region62: #{featcae_forward.1} parent=5 // pred_check_branch
      %364 = sbr.rel (%p361) target = $region64
    $region63: #{featcae_forward.1} parent=5 // pred_region
      %s365 = ssub.s32 %s17, 1
      %s366 = smul.u32 16, %s26
      %s367 = smul.u32 2, %s27
      %p368 = scmp.lt.s32.totalorder %s366, 31
      %s369 = scalar_select %p368, %s366, 31
      %p370 = scmp.lt.s32.totalorder %s367, 1
      %s371 = scalar_select %p370, %s367, 1
      %s372 = smul.addr %s369, 2
      %s373 = sadd.s32 %s371, %s372
      %s374 = smul.addr %s373, 8
      %s375 = scalar_lea.vmem %s0, %s374
      %p376 = pneg %p57
      %p377 = pneg %p54
      %p378 = pneg %p78
      %p379 = pneg %p75
      %p380 = pneg %p99
      %p381 = pneg %p96
      %p382 = pneg %p120
      %p383 = pneg %p117
      %p384 = pneg %p141
      %p385 = pneg %p138
      %p386 = pneg %p162
      %p387 = pneg %p159
      %p388 = pneg %p183
      %p389 = pneg %p180
      %p390 = pneg %p204
      %p391 = pneg %p201
      %p392 = pneg %p225
      %p393 = pneg %p222
      %p394 = pneg %p246
      %p395 = pneg %p243
      %p396 = pneg %p267
      %p397 = pneg %p264
      %p398 = pneg %p295
      %p399 = pneg %p292
      %s400 = smul.u32 16, %s26
      %s401 = smul.u32 2, %s27
      %p402 = scmp.lt.s32.totalorder %s400, 31
      %s403 = scalar_select %p402, %s400, 31
      %p404 = scmp.lt.s32.totalorder %s401, 1
      %s405 = scalar_select %p404, %s401, 1
      %s406 = smul.addr %s403, 2
      %s407 = sadd.s32 %s405, %s406
      %s408 = smul.addr %s407, 8
      %s409 = scalar_lea.vmem %s11, %s408
      %s410 = smul.u32 16, %s26
      %s411 = smul.u32 2, %s27
      %p412 = scmp.lt.s32.totalorder %s410, 31
      %s413 = scalar_select %p412, %s410, 31
      %p414 = scmp.lt.s32.totalorder %s411, 1
      %s415 = scalar_select %p414, %s411, 1
      %s416 = smul.addr %s413, 2
      %s417 = sadd.s32 %s415, %s416
      %s418 = smul.addr %s417, 8
      %s419 = scalar_lea.vmem %s0, %s418
      %s420 = smul.u32 16, %s26
      %s421 = smul.u32 2, %s27
      %s422 = smul.u32 16, %s26
      %s423 = smul.u32 2, %s27
      %p424 = scmp.lt.s32.totalorder %s422, 31
      %s425 = scalar_select %p424, %s422, 31
      %p426 = scmp.lt.s32.totalorder %s423, 1
      %s427 = scalar_select %p426, %s423, 1
      %s428 = smul.addr %s425, 2
      %s429 = sadd.s32 %s427, %s428
      %s430 = smul.addr %s429, 8
      %s431 = scalar_lea.vmem %s11, %s430
      %s432 = smul.u32 16, %s26
      %s433 = smul.u32 2, %s27
      %v434 = vld [vmem:[%s419] sm:$0xff]
      %v435 = vld [vmem:[%s419 + $0x8] sm:$0xff]
      %v436 = vld [vmem:[%s419 + $0x10] sm:$0xff]
      %v437 = vld [vmem:[%s419 + $0x18] sm:$0xff]
      %v438 = vld [vmem:[%s419 + $0x20] sm:$0xff]
      %v439 = vld [vmem:[%s419 + $0x28] sm:$0xff]
      %v440 = vld [vmem:[%s419 + $0x30] sm:$0xff]
      %v441 = vld [vmem:[%s419 + $0x38] sm:$0xff]
      %v442 = vld [vmem:[%s419 + $0x40] sm:$0xff]
      %v443 = vld [vmem:[%s419 + $0x48] sm:$0xff]
      %v444 = vld [vmem:[%s419 + $0x50] sm:$0xff]
      %v445 = vld [vmem:[%s419 + $0x58] sm:$0xff]
      %v446 = vld [vmem:[%s419 + $0x60] sm:$0xff]
      %v447 = vld [vmem:[%s419 + $0x68] sm:$0xff]
      %v448 = vld [vmem:[%s419 + $0x70] sm:$0xff]
      %v449 = vld [vmem:[%s419 + $0x78] sm:$0xff]
      %v450 = vld [vmem:[%s1] sm:$0xff]
      %v451 = vld [vmem:[%s1 + $0x8] sm:$0xff]
      %v452 = vld [vmem:[%s1 + $0x10] sm:$0xff]
      %v453 = vld [vmem:[%s1 + $0x18] sm:$0xff]
      %v454 = vld [vmem:[%s1 + $0x20] sm:$0xff]
      %v455 = vld [vmem:[%s1 + $0x28] sm:$0xff]
      %v456 = vld [vmem:[%s2] sm:$0xff]
      %v457 = vld [vmem:[%s2 + $0x8] sm:$0xff]
      %v458 = vld [vmem:[%s2 + $0x10] sm:$0xff]
      %v459 = vld [vmem:[%s2 + $0x18] sm:$0xff]
      %v460 = vld [vmem:[%s2 + $0x20] sm:$0xff]
      %v461 = vld [vmem:[%s2 + $0x28] sm:$0xff]
      %463 = vset.pattern.permute.xlu0 0
      %464 = vperm.xlu0 %463, %v456
      %v465 = vpop.permute.xlu0 %464
      %468 = vset.pattern.permute.xlu0 0
      %469 = vperm.xlu0 %468, %v457
      %v470 = vpop.permute.xlu0 %469
      %473 = vset.pattern.permute.xlu0 0
      %474 = vperm.xlu0 %473, %v458
      %v475 = vpop.permute.xlu0 %474
      %478 = vset.pattern.permute.xlu0 0
      %479 = vperm.xlu0 %478, %v459
      %v480 = vpop.permute.xlu0 %479
      %483 = vset.pattern.permute.xlu0 0
      %484 = vperm.xlu0 %483, %v460
      %v485 = vpop.permute.xlu0 %484
      %488 = vset.pattern.permute.xlu0 0
      %489 = vperm.xlu0 %488, %v461
      %v490 = vpop.permute.xlu0 %489
      %vm492 = vcmask 523264
      %v494 = vsel %vm492, %v450, 0
      %v497 = vsel %vm492, %v451, 0
      %v500 = vsel %vm492, %v452, 0
      %v503 = vsel %vm492, %v453, 0
      %v506 = vsel %vm492, %v454, 0
      %v509 = vsel %vm492, %v455, 0
      %511 = vmatpush.msra.mxu0 0.0
      %512 = vmatpush.msra.mxu0 0.0
      %513 = vmatpush.msra.mxu0 0.0
      %514 = vmatpush.msra.mxu0 0.0
      %515 = vmatpush.msra.mxu0 0.0
      %516 = vmatpush.msra.mxu0 0.0
      %517 = vmatpush.msra.mxu0 0.0
      %518 = vmatpush.msra.mxu0 0.0
      %519 = vmatpush.msra.mxu0 %v448
      %520 = vmatpush.msra.mxu0 %v446
      %521 = vmatpush.msra.mxu0 %v444
      %522 = vmatpush.msra.mxu0 %v442
      %523 = vmatpush.msra.mxu0 %v440
      %524 = vmatpush.msra.mxu0 %v438
      %525 = vmatpush.msra.mxu0 %v436
      %526 = vmatpush.msra.mxu0 %v434
      %527 = vmatmul.f32.gmra.mxu0 %v494
      %v528 = vpop.f32.mrf.mxu0
      %v529 = vadd.f32 %v465, %v528
      %530 = vmatmul.f32.gmra.mxu0 %v497
      %v531 = vpop.f32.mrf.mxu0
      %v532 = vadd.f32 %v470, %v531
      %533 = vmatmul.f32.gmra.mxu0 %v500
      %v534 = vpop.f32.mrf.mxu0
      %v535 = vadd.f32 %v475, %v534
      %536 = vmatmul.f32.gmra.mxu0 %v503
      %v537 = vpop.f32.mrf.mxu0
      %v538 = vadd.f32 %v480, %v537
      %539 = vmatmul.f32.gmra.mxu0 %v506
      %v540 = vpop.f32.mrf.mxu0
      %v541 = vadd.f32 %v485, %v540
      %542 = vmatmul.f32.gmra.mxu0 %v509
      %v543 = vpop.f32.mrf.mxu0
      %v544 = vadd.f32 %v490, %v543
      %545 = vdwg.mxu0
      %546 = vmatpush.msra.mxu0 0.0
      %547 = vmatpush.msra.mxu0 0.0
      %548 = vmatpush.msra.mxu0 0.0
      %549 = vmatpush.msra.mxu0 0.0
      %550 = vmatpush.msra.mxu0 0.0
      %551 = vmatpush.msra.mxu0 0.0
      %552 = vmatpush.msra.mxu0 0.0
      %553 = vmatpush.msra.mxu0 0.0
      %554 = vmatpush.msra.mxu0 %v449
      %555 = vmatpush.msra.mxu0 %v447
      %556 = vmatpush.msra.mxu0 %v445
      %557 = vmatpush.msra.mxu0 %v443
      %558 = vmatpush.msra.mxu0 %v441
      %559 = vmatpush.msra.mxu0 %v439
      %560 = vmatpush.msra.mxu0 %v437
      %561 = vmatpush.msra.mxu0 %v435
      %562 = vmatmul.f32.gmra.mxu0 %v494
      %v563 = vpop.f32.mrf.mxu0
      %v564 = vadd.f32 %v465, %v563
      %565 = vmatmul.f32.gmra.mxu0 %v497
      %v566 = vpop.f32.mrf.mxu0
      %v567 = vadd.f32 %v470, %v566
      %568 = vmatmul.f32.gmra.mxu0 %v500
      %v569 = vpop.f32.mrf.mxu0
      %v570 = vadd.f32 %v475, %v569
      %571 = vmatmul.f32.gmra.mxu0 %v503
      %v572 = vpop.f32.mrf.mxu0
      %v573 = vadd.f32 %v480, %v572
      %574 = vmatmul.f32.gmra.mxu0 %v506
      %v575 = vpop.f32.mrf.mxu0
      %v576 = vadd.f32 %v485, %v575
      %577 = vmatmul.f32.gmra.mxu0 %v509
      %v578 = vpop.f32.mrf.mxu0
      %v579 = vadd.f32 %v490, %v578
      %580 = vdwg.mxu0
      %v581 = vmax.f32 %v529, 0.0
      %v582 = vmax.f32 %v564, 0.0
      %v583 = vmax.f32 %v532, 0.0
      %v584 = vmax.f32 %v567, 0.0
      %v585 = vmax.f32 %v535, 0.0
      %v586 = vmax.f32 %v570, 0.0
      %v587 = vmax.f32 %v538, 0.0
      %v588 = vmax.f32 %v573, 0.0
      %v589 = vmax.f32 %v541, 0.0
      %v590 = vmax.f32 %v576, 0.0
      %v591 = vmax.f32 %v544, 0.0
      %v592 = vmax.f32 %v579, 0.0
      %v593 = vld [vmem:[%s3] sm:$0xff]
      %v594 = vld [vmem:[%s3 + $0x8] sm:$0xff]
      %v595 = vld [vmem:[%s3 + $0x10] sm:$0xff]
      %v596 = vld [vmem:[%s3 + $0x18] sm:$0xff]
      %v597 = vld [vmem:[%s4] sm:$0xff]
      %v598 = vld [vmem:[%s4 + $0x8] sm:$0xff]
      %v599 = vld [vmem:[%s4 + $0x10] sm:$0xff]
      %v600 = vld [vmem:[%s4 + $0x18] sm:$0xff]
      %602 = vset.pattern.permute.xlu0 0
      %603 = vperm.xlu0 %602, %v597
      %v604 = vpop.permute.xlu0 %603
      %607 = vset.pattern.permute.xlu0 0
      %608 = vperm.xlu0 %607, %v598
      %v609 = vpop.permute.xlu0 %608
      %612 = vset.pattern.permute.xlu0 0
      %613 = vperm.xlu0 %612, %v599
      %v614 = vpop.permute.xlu0 %613
      %617 = vset.pattern.permute.xlu0 0
      %618 = vperm.xlu0 %617, %v600
      %v619 = vpop.permute.xlu0 %618
      %vm621 = vcmask 392192
      %v623 = vsel %vm621, %v593, 0
      %v626 = vsel %vm621, %v594, 0
      %v629 = vsel %vm621, %v595, 0
      %v632 = vsel %vm621, %v596, 0
      %634 = vmatpush.msra.mxu0 0.0
      %635 = vmatpush.msra.mxu0 0.0
      %636 = vmatpush.msra.mxu0 0.0
      %637 = vmatpush.msra.mxu0 0.0
      %638 = vmatpush.msra.mxu0 0.0
      %639 = vmatpush.msra.mxu0 0.0
      %640 = vmatpush.msra.mxu0 0.0
      %641 = vmatpush.msra.mxu0 0.0
      %642 = vmatpush.msra.mxu0 0.0
      %643 = vmatpush.msra.mxu0 0.0
      %644 = vmatpush.msra.mxu0 %v591
      %645 = vmatpush.msra.mxu0 %v589
      %646 = vmatpush.msra.mxu0 %v587
      %647 = vmatpush.msra.mxu0 %v585
      %648 = vmatpush.msra.mxu0 %v583
      %649 = vmatpush.msra.mxu0 %v581
      %650 = vmatmul.f32.gmra.mxu0 %v623
      %v651 = vpop.f32.mrf.mxu0
      %v652 = vadd.f32 %v604, %v651
      %653 = vmatmul.f32.gmra.mxu0 %v626
      %v654 = vpop.f32.mrf.mxu0
      %v655 = vadd.f32 %v609, %v654
      %656 = vmatmul.f32.gmra.mxu0 %v629
      %v657 = vpop.f32.mrf.mxu0
      %v658 = vadd.f32 %v614, %v657
      %659 = vmatmul.f32.gmra.mxu0 %v632
      %v660 = vpop.f32.mrf.mxu0
      %v661 = vadd.f32 %v619, %v660
      %662 = vdwg.mxu0
      %663 = vmatpush.msra.mxu0 0.0
      %664 = vmatpush.msra.mxu0 0.0
      %665 = vmatpush.msra.mxu0 0.0
      %666 = vmatpush.msra.mxu0 0.0
      %667 = vmatpush.msra.mxu0 0.0
      %668 = vmatpush.msra.mxu0 0.0
      %669 = vmatpush.msra.mxu0 0.0
      %670 = vmatpush.msra.mxu0 0.0
      %671 = vmatpush.msra.mxu0 0.0
      %672 = vmatpush.msra.mxu0 0.0
      %673 = vmatpush.msra.mxu0 %v592
      %674 = vmatpush.msra.mxu0 %v590
      %675 = vmatpush.msra.mxu0 %v588
      %676 = vmatpush.msra.mxu0 %v586
      %677 = vmatpush.msra.mxu0 %v584
      %678 = vmatpush.msra.mxu0 %v582
      %679 = vmatmul.f32.gmra.mxu0 %v623
      %v680 = vpop.f32.mrf.mxu0
      %v681 = vadd.f32 %v604, %v680
      %682 = vmatmul.f32.gmra.mxu0 %v626
      %v683 = vpop.f32.mrf.mxu0
      %v684 = vadd.f32 %v609, %v683
      %685 = vmatmul.f32.gmra.mxu0 %v629
      %v686 = vpop.f32.mrf.mxu0
      %v687 = vadd.f32 %v614, %v686
      %688 = vmatmul.f32.gmra.mxu0 %v632
      %v689 = vpop.f32.mrf.mxu0
      %v690 = vadd.f32 %v619, %v689
      %691 = vdwg.mxu0
      %v692 = vmax.f32 %v652, 0.0
      %v693 = vmax.f32 %v681, 0.0
      %v694 = vmax.f32 %v655, 0.0
      %v695 = vmax.f32 %v684, 0.0
      %v696 = vmax.f32 %v658, 0.0
      %v697 = vmax.f32 %v687, 0.0
      %v698 = vmax.f32 %v661, 0.0
      %v699 = vmax.f32 %v690, 0.0
      %v700 = vld [vmem:[%s5] sm:$0xff]
      %v701 = vld [vmem:[%s5 + $0x8] sm:$0xff]
      %v702 = vld [vmem:[%s5 + $0x10] sm:$0xff]
      %v703 = vld [vmem:[%s5 + $0x18] sm:$0xff]
      %v704 = vld [vmem:[%s6] sm:$0xff]
      %v705 = vld [vmem:[%s6 + $0x8] sm:$0xff]
      %v706 = vld [vmem:[%s6 + $0x10] sm:$0xff]
      %v707 = vld [vmem:[%s6 + $0x18] sm:$0xff]
      %709 = vset.pattern.permute.xlu0 0
      %710 = vperm.xlu0 %709, %v704
      %v711 = vpop.permute.xlu0 %710
      %714 = vset.pattern.permute.xlu0 0
      %715 = vperm.xlu0 %714, %v705
      %v716 = vpop.permute.xlu0 %715
      %719 = vset.pattern.permute.xlu0 0
      %720 = vperm.xlu0 %719, %v706
      %v721 = vpop.permute.xlu0 %720
      %724 = vset.pattern.permute.xlu0 0
      %725 = vperm.xlu0 %724, %v707
      %v726 = vpop.permute.xlu0 %725
      %vm728 = vcmask 261120
      %v730 = vsel %vm728, %v700, 0
      %v733 = vsel %vm728, %v701, 0
      %v736 = vsel %vm728, %v702, 0
      %v739 = vsel %vm728, %v703, 0
      %741 = vmatpush.msra.mxu0 0.0
      %742 = vmatpush.msra.mxu0 0.0
      %743 = vmatpush.msra.mxu0 0.0
      %744 = vmatpush.msra.mxu0 0.0
      %745 = vmatpush.msra.mxu0 0.0
      %746 = vmatpush.msra.mxu0 0.0
      %747 = vmatpush.msra.mxu0 0.0
      %748 = vmatpush.msra.mxu0 0.0
      %749 = vmatpush.msra.mxu0 0.0
      %750 = vmatpush.msra.mxu0 0.0
      %751 = vmatpush.msra.mxu0 0.0
      %752 = vmatpush.msra.mxu0 0.0
      %753 = vmatpush.msra.mxu0 %v698
      %754 = vmatpush.msra.mxu0 %v696
      %755 = vmatpush.msra.mxu0 %v694
      %756 = vmatpush.msra.mxu0 %v692
      %757 = vmatmul.f32.gmra.mxu0 %v730
      %v758 = vpop.f32.mrf.mxu0
      %v759 = vadd.f32 %v711, %v758
      %760 = vmatmul.f32.gmra.mxu0 %v733
      %v761 = vpop.f32.mrf.mxu0
      %v762 = vadd.f32 %v716, %v761
      %763 = vmatmul.f32.gmra.mxu0 %v736
      %v764 = vpop.f32.mrf.mxu0
      %v765 = vadd.f32 %v721, %v764
      %766 = vmatmul.f32.gmra.mxu0 %v739
      %v767 = vpop.f32.mrf.mxu0
      %v768 = vadd.f32 %v726, %v767
      %769 = vdwg.mxu0
      %770 = vmatpush.msra.mxu0 0.0
      %771 = vmatpush.msra.mxu0 0.0
      %772 = vmatpush.msra.mxu0 0.0
      %773 = vmatpush.msra.mxu0 0.0
      %774 = vmatpush.msra.mxu0 0.0
      %775 = vmatpush.msra.mxu0 0.0
      %776 = vmatpush.msra.mxu0 0.0
      %777 = vmatpush.msra.mxu0 0.0
      %778 = vmatpush.msra.mxu0 0.0
      %779 = vmatpush.msra.mxu0 0.0
      %780 = vmatpush.msra.mxu0 0.0
      %781 = vmatpush.msra.mxu0 0.0
      %782 = vmatpush.msra.mxu0 %v699
      %783 = vmatpush.msra.mxu0 %v697
      %784 = vmatpush.msra.mxu0 %v695
      %785 = vmatpush.msra.mxu0 %v693
      %786 = vmatmul.f32.gmra.mxu0 %v730
      %v787 = vpop.f32.mrf.mxu0
      %v788 = vadd.f32 %v711, %v787
      %789 = vmatmul.f32.gmra.mxu0 %v733
      %v790 = vpop.f32.mrf.mxu0
      %v791 = vadd.f32 %v716, %v790
      %792 = vmatmul.f32.gmra.mxu0 %v736
      %v793 = vpop.f32.mrf.mxu0
      %v794 = vadd.f32 %v721, %v793
      %795 = vmatmul.f32.gmra.mxu0 %v739
      %v796 = vpop.f32.mrf.mxu0
      %v797 = vadd.f32 %v726, %v796
      %798 = vdwg.mxu0
      %v799 = vmax.f32 %v759, 0.0
      %v800 = vmax.f32 %v788, 0.0
      %v801 = vmax.f32 %v762, 0.0
      %v802 = vmax.f32 %v791, 0.0
      %v803 = vmax.f32 %v765, 0.0
      %v804 = vmax.f32 %v794, 0.0
      %v805 = vmax.f32 %v768, 0.0
      %v806 = vmax.f32 %v797, 0.0
      %v807 = vld [vmem:[%s7] sm:$0xff]
      %v808 = vld [vmem:[%s7 + $0x8] sm:$0xff]
      %v809 = vld [vmem:[%s7 + $0x10] sm:$0xff]
      %v810 = vld [vmem:[%s7 + $0x18] sm:$0xff]
      %v811 = vld [vmem:[%s7 + $0x20] sm:$0xff]
      %v812 = vld [vmem:[%s7 + $0x28] sm:$0xff]
      %v813 = vld [vmem:[%s8] sm:$0xff]
      %v814 = vld [vmem:[%s8 + $0x8] sm:$0xff]
      %v815 = vld [vmem:[%s8 + $0x10] sm:$0xff]
      %v816 = vld [vmem:[%s8 + $0x18] sm:$0xff]
      %v817 = vld [vmem:[%s8 + $0x20] sm:$0xff]
      %v818 = vld [vmem:[%s8 + $0x28] sm:$0xff]
      %820 = vset.pattern.permute.xlu0 0
      %821 = vperm.xlu0 %820, %v813
      %v822 = vpop.permute.xlu0 %821
      %825 = vset.pattern.permute.xlu0 0
      %826 = vperm.xlu0 %825, %v814
      %v827 = vpop.permute.xlu0 %826
      %830 = vset.pattern.permute.xlu0 0
      %831 = vperm.xlu0 %830, %v815
      %v832 = vpop.permute.xlu0 %831
      %835 = vset.pattern.permute.xlu0 0
      %836 = vperm.xlu0 %835, %v816
      %v837 = vpop.permute.xlu0 %836
      %840 = vset.pattern.permute.xlu0 0
      %841 = vperm.xlu0 %840, %v817
      %v842 = vpop.permute.xlu0 %841
      %845 = vset.pattern.permute.xlu0 0
      %846 = vperm.xlu0 %845, %v818
      %v847 = vpop.permute.xlu0 %846
      %v850 = vsel %vm728, %v807, 0
      %v853 = vsel %vm728, %v808, 0
      %v856 = vsel %vm728, %v809, 0
      %v859 = vsel %vm728, %v810, 0
      %v862 = vsel %vm728, %v811, 0
      %v865 = vsel %vm728, %v812, 0
      %867 = vmatpush.msra.mxu0 0.0
      %868 = vmatpush.msra.mxu0 0.0
      %869 = vmatpush.msra.mxu0 0.0
      %870 = vmatpush.msra.mxu0 0.0
      %871 = vmatpush.msra.mxu0 0.0
      %872 = vmatpush.msra.mxu0 0.0
      %873 = vmatpush.msra.mxu0 0.0
      %874 = vmatpush.msra.mxu0 0.0
      %875 = vmatpush.msra.mxu0 0.0
      %876 = vmatpush.msra.mxu0 0.0
      %877 = vmatpush.msra.mxu0 0.0
      %878 = vmatpush.msra.mxu0 0.0
      %879 = vmatpush.msra.mxu0 %v805
      %880 = vmatpush.msra.mxu0 %v803
      %881 = vmatpush.msra.mxu0 %v801
      %882 = vmatpush.msra.mxu0 %v799
      %883 = vmatmul.f32.gmra.mxu0 %v850
      %v884 = vpop.f32.mrf.mxu0
      %v885 = vadd.f32 %v822, %v884
      %886 = vmatmul.f32.gmra.mxu0 %v853
      %v887 = vpop.f32.mrf.mxu0
      %v888 = vadd.f32 %v827, %v887
      %889 = vmatmul.f32.gmra.mxu0 %v856
      %v890 = vpop.f32.mrf.mxu0
      %v891 = vadd.f32 %v832, %v890
      %892 = vmatmul.f32.gmra.mxu0 %v859
      %v893 = vpop.f32.mrf.mxu0
      %v894 = vadd.f32 %v837, %v893
      %895 = vmatmul.f32.gmra.mxu0 %v862
      %v896 = vpop.f32.mrf.mxu0
      %v897 = vadd.f32 %v842, %v896
      %898 = vmatmul.f32.gmra.mxu0 %v865
      %v899 = vpop.f32.mrf.mxu0
      %v900 = vadd.f32 %v847, %v899
      %901 = vdwg.mxu0
      %902 = vmatpush.msra.mxu0 0.0
      %903 = vmatpush.msra.mxu0 0.0
      %904 = vmatpush.msra.mxu0 0.0
      %905 = vmatpush.msra.mxu0 0.0
      %906 = vmatpush.msra.mxu0 0.0
      %907 = vmatpush.msra.mxu0 0.0
      %908 = vmatpush.msra.mxu0 0.0
      %909 = vmatpush.msra.mxu0 0.0
      %910 = vmatpush.msra.mxu0 0.0
      %911 = vmatpush.msra.mxu0 0.0
      %912 = vmatpush.msra.mxu0 0.0
      %913 = vmatpush.msra.mxu0 0.0
      %914 = vmatpush.msra.mxu0 %v806
      %915 = vmatpush.msra.mxu0 %v804
      %916 = vmatpush.msra.mxu0 %v802
      %917 = vmatpush.msra.mxu0 %v800
      %918 = vmatmul.f32.gmra.mxu0 %v850
      %v919 = vpop.f32.mrf.mxu0
      %v920 = vadd.f32 %v822, %v919
      %921 = vmatmul.f32.gmra.mxu0 %v853
      %v922 = vpop.f32.mrf.mxu0
      %v923 = vadd.f32 %v827, %v922
      %924 = vmatmul.f32.gmra.mxu0 %v856
      %v925 = vpop.f32.mrf.mxu0
      %v926 = vadd.f32 %v832, %v925
      %927 = vmatmul.f32.gmra.mxu0 %v859
      %v928 = vpop.f32.mrf.mxu0
      %v929 = vadd.f32 %v837, %v928
      %930 = vmatmul.f32.gmra.mxu0 %v862
      %v931 = vpop.f32.mrf.mxu0
      %v932 = vadd.f32 %v842, %v931
      %933 = vmatmul.f32.gmra.mxu0 %v865
      %v934 = vpop.f32.mrf.mxu0
      %v935 = vadd.f32 %v847, %v934
      %936 = vdwg.mxu0
      %v937 = vmax.f32 %v885, 0.0
      %v938 = vmax.f32 %v920, 0.0
      %v939 = vmax.f32 %v888, 0.0
      %v940 = vmax.f32 %v923, 0.0
      %v941 = vmax.f32 %v891, 0.0
      %v942 = vmax.f32 %v926, 0.0
      %v943 = vmax.f32 %v894, 0.0
      %v944 = vmax.f32 %v929, 0.0
      %v945 = vmax.f32 %v897, 0.0
      %v946 = vmax.f32 %v932, 0.0
      %v947 = vmax.f32 %v900, 0.0
      %v948 = vmax.f32 %v935, 0.0
      %v949 = vld [vmem:[%s9] sm:$0xff]
      %v950 = vld [vmem:[%s9 + $0x8] sm:$0xff]
      %v951 = vld [vmem:[%s9 + $0x10] sm:$0xff]
      %v952 = vld [vmem:[%s9 + $0x18] sm:$0xff]
      %v953 = vld [vmem:[%s9 + $0x20] sm:$0xff]
      %v954 = vld [vmem:[%s9 + $0x28] sm:$0xff]
      %v955 = vld [vmem:[%s9 + $0x30] sm:$0xff]
      %v956 = vld [vmem:[%s9 + $0x38] sm:$0xff]
      %v957 = vld [vmem:[%s10] sm:$0xff]
      %v958 = vld [vmem:[%s10 + $0x8] sm:$0xff]
      %v959 = vld [vmem:[%s10 + $0x10] sm:$0xff]
      %v960 = vld [vmem:[%s10 + $0x18] sm:$0xff]
      %v961 = vld [vmem:[%s10 + $0x20] sm:$0xff]
      %v962 = vld [vmem:[%s10 + $0x28] sm:$0xff]
      %v963 = vld [vmem:[%s10 + $0x30] sm:$0xff]
      %v964 = vld [vmem:[%s10 + $0x38] sm:$0xff]
      %966 = vset.pattern.permute.xlu0 0
      %967 = vperm.xlu0 %966, %v957
      %v968 = vpop.permute.xlu0 %967
      %971 = vset.pattern.permute.xlu0 0
      %972 = vperm.xlu0 %971, %v958
      %v973 = vpop.permute.xlu0 %972
      %976 = vset.pattern.permute.xlu0 0
      %977 = vperm.xlu0 %976, %v959
      %v978 = vpop.permute.xlu0 %977
      %981 = vset.pattern.permute.xlu0 0
      %982 = vperm.xlu0 %981, %v960
      %v983 = vpop.permute.xlu0 %982
      %986 = vset.pattern.permute.xlu0 0
      %987 = vperm.xlu0 %986, %v961
      %v988 = vpop.permute.xlu0 %987
      %991 = vset.pattern.permute.xlu0 0
      %992 = vperm.xlu0 %991, %v962
      %v993 = vpop.permute.xlu0 %992
      %996 = vset.pattern.permute.xlu0 0
      %997 = vperm.xlu0 %996, %v963
      %v998 = vpop.permute.xlu0 %997
      %1001 = vset.pattern.permute.xlu0 0
      %1002 = vperm.xlu0 %1001, %v964
      %v1003 = vpop.permute.xlu0 %1002
      %v1006 = vsel %vm621, %v949, 0
      %v1009 = vsel %vm621, %v950, 0
      %v1012 = vsel %vm621, %v951, 0
      %v1015 = vsel %vm621, %v952, 0
      %v1018 = vsel %vm621, %v953, 0
      %v1021 = vsel %vm621, %v954, 0
      %v1024 = vsel %vm621, %v955, 0
      %v1027 = vsel %vm621, %v956, 0
      %1029 = vmatpush.msra.mxu0 0.0
      %1030 = vmatpush.msra.mxu0 0.0
      %1031 = vmatpush.msra.mxu0 0.0
      %1032 = vmatpush.msra.mxu0 0.0
      %1033 = vmatpush.msra.mxu0 0.0
      %1034 = vmatpush.msra.mxu0 0.0
      %1035 = vmatpush.msra.mxu0 0.0
      %1036 = vmatpush.msra.mxu0 0.0
      %1037 = vmatpush.msra.mxu0 0.0
      %1038 = vmatpush.msra.mxu0 0.0
      %1039 = vmatpush.msra.mxu0 %v947
      %1040 = vmatpush.msra.mxu0 %v945
      %1041 = vmatpush.msra.mxu0 %v943
      %1042 = vmatpush.msra.mxu0 %v941
      %1043 = vmatpush.msra.mxu0 %v939
      %1044 = vmatpush.msra.mxu0 %v937
      %1045 = vmatmul.f32.gmra.mxu0 %v1006
      %v1046 = vpop.f32.mrf.mxu0
      %v1047 = vadd.f32 %v968, %v1046
      %1048 = vmatmul.f32.gmra.mxu0 %v1009
      %v1049 = vpop.f32.mrf.mxu0
      %v1050 = vadd.f32 %v973, %v1049
      %1051 = vmatmul.f32.gmra.mxu0 %v1012
      %v1052 = vpop.f32.mrf.mxu0
      %v1053 = vadd.f32 %v978, %v1052
      %1054 = vmatmul.f32.gmra.mxu0 %v1015
      %v1055 = vpop.f32.mrf.mxu0
      %v1056 = vadd.f32 %v983, %v1055
      %1057 = vmatmul.f32.gmra.mxu0 %v1018
      %v1058 = vpop.f32.mrf.mxu0
      %v1059 = vadd.f32 %v988, %v1058
      %1060 = vmatmul.f32.gmra.mxu0 %v1021
      %v1061 = vpop.f32.mrf.mxu0
      %v1062 = vadd.f32 %v993, %v1061
      %1063 = vmatmul.f32.gmra.mxu0 %v1024
      %v1064 = vpop.f32.mrf.mxu0
      %v1065 = vadd.f32 %v998, %v1064
      %1066 = vmatmul.f32.gmra.mxu0 %v1027
      %v1067 = vpop.f32.mrf.mxu0
      %v1068 = vadd.f32 %v1003, %v1067
      %1069 = vdwg.mxu0
      %1070 = vmatpush.msra.mxu0 0.0
      %1071 = vmatpush.msra.mxu0 0.0
      %1072 = vmatpush.msra.mxu0 0.0
      %1073 = vmatpush.msra.mxu0 0.0
      %1074 = vmatpush.msra.mxu0 0.0
      %1075 = vmatpush.msra.mxu0 0.0
      %1076 = vmatpush.msra.mxu0 0.0
      %1077 = vmatpush.msra.mxu0 0.0
      %1078 = vmatpush.msra.mxu0 0.0
      %1079 = vmatpush.msra.mxu0 0.0
      %1080 = vmatpush.msra.mxu0 %v948
      %1081 = vmatpush.msra.mxu0 %v946
      %1082 = vmatpush.msra.mxu0 %v944
      %1083 = vmatpush.msra.mxu0 %v942
      %1084 = vmatpush.msra.mxu0 %v940
      %1085 = vmatpush.msra.mxu0 %v938
      %1086 = vmatmul.f32.gmra.mxu0 %v1006
      %v1087 = vpop.f32.mrf.mxu0
      %v1088 = vadd.f32 %v968, %v1087
      %1089 = vmatmul.f32.gmra.mxu0 %v1009
      %v1090 = vpop.f32.mrf.mxu0
      %v1091 = vadd.f32 %v973, %v1090
      %1092 = vmatmul.f32.gmra.mxu0 %v1012
      %v1093 = vpop.f32.mrf.mxu0
      %v1094 = vadd.f32 %v978, %v1093
      %1095 = vmatmul.f32.gmra.mxu0 %v1015
      %v1096 = vpop.f32.mrf.mxu0
      %v1097 = vadd.f32 %v983, %v1096
      %1098 = vmatmul.f32.gmra.mxu0 %v1018
      %v1099 = vpop.f32.mrf.mxu0
      %v1100 = vadd.f32 %v988, %v1099
      %1101 = vmatmul.f32.gmra.mxu0 %v1021
      %v1102 = vpop.f32.mrf.mxu0
      %v1103 = vadd.f32 %v993, %v1102
      %1104 = vmatmul.f32.gmra.mxu0 %v1024
      %v1105 = vpop.f32.mrf.mxu0
      %v1106 = vadd.f32 %v998, %v1105
      %1107 = vmatmul.f32.gmra.mxu0 %v1027
      %v1108 = vpop.f32.mrf.mxu0
      %v1109 = vadd.f32 %v1003, %v1108
      %1110 = vdwg.mxu0
      %1111 = vst [vmem:[%s431] sm:$0xff] %v1047
      %1112 = vst [vmem:[%s431 + $0x8] sm:$0xff] %v1088
      %1113 = vst [vmem:[%s431 + $0x10] sm:$0xff] %v1050
      %1114 = vst [vmem:[%s431 + $0x18] sm:$0xff] %v1091
      %1115 = vst [vmem:[%s431 + $0x20] sm:$0xff] %v1053
      %1116 = vst [vmem:[%s431 + $0x28] sm:$0xff] %v1094
      %1117 = vst [vmem:[%s431 + $0x30] sm:$0xff] %v1056
      %1118 = vst [vmem:[%s431 + $0x38] sm:$0xff] %v1097
      %1119 = vst [vmem:[%s431 + $0x40] sm:$0xff] %v1059
      %1120 = vst [vmem:[%s431 + $0x48] sm:$0xff] %v1100
      %1121 = vst [vmem:[%s431 + $0x50] sm:$0xff] %v1062
      %1122 = vst [vmem:[%s431 + $0x58] sm:$0xff] %v1103
      %1123 = vst [vmem:[%s431 + $0x60] sm:$0xff] %v1065
      %1124 = vst [vmem:[%s431 + $0x68] sm:$0xff] %v1106
      %1125 = vst [vmem:[%s431 + $0x70] sm:$0xff] %v1068
      %1126 = vst [vmem:[%s431 + $0x78] sm:$0xff] %v1109
      %v1127 = vld [vmem:[%s419 + $0x80] sm:$0xff]
      %v1128 = vld [vmem:[%s419 + $0x88] sm:$0xff]
      %v1129 = vld [vmem:[%s419 + $0x90] sm:$0xff]
      %v1130 = vld [vmem:[%s419 + $0x98] sm:$0xff]
      %v1131 = vld [vmem:[%s419 + $0xa0] sm:$0xff]
      %v1132 = vld [vmem:[%s419 + $0xa8] sm:$0xff]
      %v1133 = vld [vmem:[%s419 + $0xb0] sm:$0xff]
      %v1134 = vld [vmem:[%s419 + $0xb8] sm:$0xff]
      %v1135 = vld [vmem:[%s419 + $0xc0] sm:$0xff]
      %v1136 = vld [vmem:[%s419 + $0xc8] sm:$0xff]
      %v1137 = vld [vmem:[%s419 + $0xd0] sm:$0xff]
      %v1138 = vld [vmem:[%s419 + $0xd8] sm:$0xff]
      %v1139 = vld [vmem:[%s419 + $0xe0] sm:$0xff]
      %v1140 = vld [vmem:[%s419 + $0xe8] sm:$0xff]
      %v1141 = vld [vmem:[%s419 + $0xf0] sm:$0xff]
      %v1142 = vld [vmem:[%s419 + $0xf8] sm:$0xff]
      %v1143 = vld [vmem:[%s1] sm:$0xff]
      %v1144 = vld [vmem:[%s1 + $0x8] sm:$0xff]
      %v1145 = vld [vmem:[%s1 + $0x10] sm:$0xff]
      %v1146 = vld [vmem:[%s1 + $0x18] sm:$0xff]
      %v1147 = vld [vmem:[%s1 + $0x20] sm:$0xff]
      %v1148 = vld [vmem:[%s1 + $0x28] sm:$0xff]
      %v1149 = vld [vmem:[%s2] sm:$0xff]
      %v1150 = vld [vmem:[%s2 + $0x8] sm:$0xff]
      %v1151 = vld [vmem:[%s2 + $0x10] sm:$0xff]
      %v1152 = vld [vmem:[%s2 + $0x18] sm:$0xff]
      %v1153 = vld [vmem:[%s2 + $0x20] sm:$0xff]
      %v1154 = vld [vmem:[%s2 + $0x28] sm:$0xff]
      %1156 = vset.pattern.permute.xlu0 0
      %1157 = vperm.xlu0 %1156, %v1149
      %v1158 = vpop.permute.xlu0 %1157
      %1161 = vset.pattern.permute.xlu0 0
      %1162 = vperm.xlu0 %1161, %v1150
      %v1163 = vpop.permute.xlu0 %1162
      %1166 = vset.pattern.permute.xlu0 0
      %1167 = vperm.xlu0 %1166, %v1151
      %v1168 = vpop.permute.xlu0 %1167
      %1171 = vset.pattern.permute.xlu0 0
      %1172 = vperm.xlu0 %1171, %v1152
      %v1173 = vpop.permute.xlu0 %1172
      %1176 = vset.pattern.permute.xlu0 0
      %1177 = vperm.xlu0 %1176, %v1153
      %v1178 = vpop.permute.xlu0 %1177
      %1181 = vset.pattern.permute.xlu0 0
      %1182 = vperm.xlu0 %1181, %v1154
      %v1183 = vpop.permute.xlu0 %1182
      %v1186 = vsel %vm492, %v1143, 0
      %v1189 = vsel %vm492, %v1144, 0
      %v1192 = vsel %vm492, %v1145, 0
      %v1195 = vsel %vm492, %v1146, 0
      %v1198 = vsel %vm492, %v1147, 0
      %v1201 = vsel %vm492, %v1148, 0
      %1203 = vmatpush.msra.mxu0 0.0
      %1204 = vmatpush.msra.mxu0 0.0
      %1205 = vmatpush.msra.mxu0 0.0
      %1206 = vmatpush.msra.mxu0 0.0
      %1207 = vmatpush.msra.mxu0 0.0
      %1208 = vmatpush.msra.mxu0 0.0
      %1209 = vmatpush.msra.mxu0 0.0
      %1210 = vmatpush.msra.mxu0 0.0
      %1211 = vmatpush.msra.mxu0 %v1141
      %1212 = vmatpush.msra.mxu0 %v1139
      %1213 = vmatpush.msra.mxu0 %v1137
      %1214 = vmatpush.msra.mxu0 %v1135
      %1215 = vmatpush.msra.mxu0 %v1133
      %1216 = vmatpush.msra.mxu0 %v1131
      %1217 = vmatpush.msra.mxu0 %v1129
      %1218 = vmatpush.msra.mxu0 %v1127
      %1219 = vmatmul.f32.gmra.mxu0 %v1186
      %v1220 = vpop.f32.mrf.mxu0
      %v1221 = vadd.f32 %v1158, %v1220
      %1222 = vmatmul.f32.gmra.mxu0 %v1189
      %v1223 = vpop.f32.mrf.mxu0
      %v1224 = vadd.f32 %v1163, %v1223
      %1225 = vmatmul.f32.gmra.mxu0 %v1192
      %v1226 = vpop.f32.mrf.mxu0
      %v1227 = vadd.f32 %v1168, %v1226
      %1228 = vmatmul.f32.gmra.mxu0 %v1195
      %v1229 = vpop.f32.mrf.mxu0
      %v1230 = vadd.f32 %v1173, %v1229
      %1231 = vmatmul.f32.gmra.mxu0 %v1198
      %v1232 = vpop.f32.mrf.mxu0
      %v1233 = vadd.f32 %v1178, %v1232
      %1234 = vmatmul.f32.gmra.mxu0 %v1201
      %v1235 = vpop.f32.mrf.mxu0
      %v1236 = vadd.f32 %v1183, %v1235
      %1237 = vdwg.mxu0
      %1238 = vmatpush.msra.mxu0 0.0
      %1239 = vmatpush.msra.mxu0 0.0
      %1240 = vmatpush.msra.mxu0 0.0
      %1241 = vmatpush.msra.mxu0 0.0
      %1242 = vmatpush.msra.mxu0 0.0
      %1243 = vmatpush.msra.mxu0 0.0
      %1244 = vmatpush.msra.mxu0 0.0
      %1245 = vmatpush.msra.mxu0 0.0
      %1246 = vmatpush.msra.mxu0 %v1142
      %1247 = vmatpush.msra.mxu0 %v1140
      %1248 = vmatpush.msra.mxu0 %v1138
      %1249 = vmatpush.msra.mxu0 %v1136
      %1250 = vmatpush.msra.mxu0 %v1134
      %1251 = vmatpush.msra.mxu0 %v1132
      %1252 = vmatpush.msra.mxu0 %v1130
      %1253 = vmatpush.msra.mxu0 %v1128
      %1254 = vmatmul.f32.gmra.mxu0 %v1186
      %v1255 = vpop.f32.mrf.mxu0
      %v1256 = vadd.f32 %v1158, %v1255
      %1257 = vmatmul.f32.gmra.mxu0 %v1189
      %v1258 = vpop.f32.mrf.mxu0
      %v1259 = vadd.f32 %v1163, %v1258
      %1260 = vmatmul.f32.gmra.mxu0 %v1192
      %v1261 = vpop.f32.mrf.mxu0
      %v1262 = vadd.f32 %v1168, %v1261
      %1263 = vmatmul.f32.gmra.mxu0 %v1195
      %v1264 = vpop.f32.mrf.mxu0
      %v1265 = vadd.f32 %v1173, %v1264
      %1266 = vmatmul.f32.gmra.mxu0 %v1198
      %v1267 = vpop.f32.mrf.mxu0
      %v1268 = vadd.f32 %v1178, %v1267
      %1269 = vmatmul.f32.gmra.mxu0 %v1201
      %v1270 = vpop.f32.mrf.mxu0
      %v1271 = vadd.f32 %v1183, %v1270
      %1272 = vdwg.mxu0
      %v1273 = vmax.f32 %v1221, 0.0
      %v1274 = vmax.f32 %v1256, 0.0
      %v1275 = vmax.f32 %v1224, 0.0
      %v1276 = vmax.f32 %v1259, 0.0
      %v1277 = vmax.f32 %v1227, 0.0
      %v1278 = vmax.f32 %v1262, 0.0
      %v1279 = vmax.f32 %v1230, 0.0
      %v1280 = vmax.f32 %v1265, 0.0
      %v1281 = vmax.f32 %v1233, 0.0
      %v1282 = vmax.f32 %v1268, 0.0
      %v1283 = vmax.f32 %v1236, 0.0
      %v1284 = vmax.f32 %v1271, 0.0
      %v1285 = vld [vmem:[%s3] sm:$0xff]
      %v1286 = vld [vmem:[%s3 + $0x8] sm:$0xff]
      %v1287 = vld [vmem:[%s3 + $0x10] sm:$0xff]
      %v1288 = vld [vmem:[%s3 + $0x18] sm:$0xff]
      %v1289 = vld [vmem:[%s4] sm:$0xff]
      %v1290 = vld [vmem:[%s4 + $0x8] sm:$0xff]
      %v1291 = vld [vmem:[%s4 + $0x10] sm:$0xff]
      %v1292 = vld [vmem:[%s4 + $0x18] sm:$0xff]
      %1294 = vset.pattern.permute.xlu0 0
      %1295 = vperm.xlu0 %1294, %v1289
      %v1296 = vpop.permute.xlu0 %1295
      %1299 = vset.pattern.permute.xlu0 0
      %1300 = vperm.xlu0 %1299, %v1290
      %v1301 = vpop.permute.xlu0 %1300
      %1304 = vset.pattern.permute.xlu0 0
      %1305 = vperm.xlu0 %1304, %v1291
      %v1306 = vpop.permute.xlu0 %1305
      %1309 = vset.pattern.permute.xlu0 0
      %1310 = vperm.xlu0 %1309, %v1292
      %v1311 = vpop.permute.xlu0 %1310
      %v1314 = vsel %vm621, %v1285, 0
      %v1317 = vsel %vm621, %v1286, 0
      %v1320 = vsel %vm621, %v1287, 0
      %v1323 = vsel %vm621, %v1288, 0
      %1325 = vmatpush.msra.mxu0 0.0
      %1326 = vmatpush.msra.mxu0 0.0
      %1327 = vmatpush.msra.mxu0 0.0
      %1328 = vmatpush.msra.mxu0 0.0
      %1329 = vmatpush.msra.mxu0 0.0
      %1330 = vmatpush.msra.mxu0 0.0
      %1331 = vmatpush.msra.mxu0 0.0
      %1332 = vmatpush.msra.mxu0 0.0
      %1333 = vmatpush.msra.mxu0 0.0
      %1334 = vmatpush.msra.mxu0 0.0
      %1335 = vmatpush.msra.mxu0 %v1283
      %1336 = vmatpush.msra.mxu0 %v1281
      %1337 = vmatpush.msra.mxu0 %v1279
      %1338 = vmatpush.msra.mxu0 %v1277
      %1339 = vmatpush.msra.mxu0 %v1275
      %1340 = vmatpush.msra.mxu0 %v1273
      %1341 = vmatmul.f32.gmra.mxu0 %v1314
      %v1342 = vpop.f32.mrf.mxu0
      %v1343 = vadd.f32 %v1296, %v1342
      %1344 = vmatmul.f32.gmra.mxu0 %v1317
      %v1345 = vpop.f32.mrf.mxu0
      %v1346 = vadd.f32 %v1301, %v1345
      %1347 = vmatmul.f32.gmra.mxu0 %v1320
      %v1348 = vpop.f32.mrf.mxu0
      %v1349 = vadd.f32 %v1306, %v1348
      %1350 = vmatmul.f32.gmra.mxu0 %v1323
      %v1351 = vpop.f32.mrf.mxu0
      %v1352 = vadd.f32 %v1311, %v1351
      %1353 = vdwg.mxu0
      %1354 = vmatpush.msra.mxu0 0.0
      %1355 = vmatpush.msra.mxu0 0.0
      %1356 = vmatpush.msra.mxu0 0.0
      %1357 = vmatpush.msra.mxu0 0.0
      %1358 = vmatpush.msra.mxu0 0.0
      %1359 = vmatpush.msra.mxu0 0.0
      %1360 = vmatpush.msra.mxu0 0.0
      %1361 = vmatpush.msra.mxu0 0.0
      %1362 = vmatpush.msra.mxu0 0.0
      %1363 = vmatpush.msra.mxu0 0.0
      %1364 = vmatpush.msra.mxu0 %v1284
      %1365 = vmatpush.msra.mxu0 %v1282
      %1366 = vmatpush.msra.mxu0 %v1280
      %1367 = vmatpush.msra.mxu0 %v1278
      %1368 = vmatpush.msra.mxu0 %v1276
      %1369 = vmatpush.msra.mxu0 %v1274
      %1370 = vmatmul.f32.gmra.mxu0 %v1314
      %v1371 = vpop.f32.mrf.mxu0
      %v1372 = vadd.f32 %v1296, %v1371
      %1373 = vmatmul.f32.gmra.mxu0 %v1317
      %v1374 = vpop.f32.mrf.mxu0
      %v1375 = vadd.f32 %v1301, %v1374
      %1376 = vmatmul.f32.gmra.mxu0 %v1320
      %v1377 = vpop.f32.mrf.mxu0
      %v1378 = vadd.f32 %v1306, %v1377
      %1379 = vmatmul.f32.gmra.mxu0 %v1323
      %v1380 = vpop.f32.mrf.mxu0
      %v1381 = vadd.f32 %v1311, %v1380
      %1382 = vdwg.mxu0
      %v1383 = vmax.f32 %v1343, 0.0
      %v1384 = vmax.f32 %v1372, 0.0
      %v1385 = vmax.f32 %v1346, 0.0
      %v1386 = vmax.f32 %v1375, 0.0
      %v1387 = vmax.f32 %v1349, 0.0
      %v1388 = vmax.f32 %v1378, 0.0
      %v1389 = vmax.f32 %v1352, 0.0
      %v1390 = vmax.f32 %v1381, 0.0
      %v1391 = vld [vmem:[%s5] sm:$0xff]
      %v1392 = vld [vmem:[%s5 + $0x8] sm:$0xff]
      %v1393 = vld [vmem:[%s5 + $0x10] sm:$0xff]
      %v1394 = vld [vmem:[%s5 + $0x18] sm:$0xff]
      %v1395 = vld [vmem:[%s6] sm:$0xff]
      %v1396 = vld [vmem:[%s6 + $0x8] sm:$0xff]
      %v1397 = vld [vmem:[%s6 + $0x10] sm:$0xff]
      %v1398 = vld [vmem:[%s6 + $0x18] sm:$0xff]
      %1400 = vset.pattern.permute.xlu0 0
      %1401 = vperm.xlu0 %1400, %v1395
      %v1402 = vpop.permute.xlu0 %1401
      %1405 = vset.pattern.permute.xlu0 0
      %1406 = vperm.xlu0 %1405, %v1396
      %v1407 = vpop.permute.xlu0 %1406
      %1410 = vset.pattern.permute.xlu0 0
      %1411 = vperm.xlu0 %1410, %v1397
      %v1412 = vpop.permute.xlu0 %1411
      %1415 = vset.pattern.permute.xlu0 0
      %1416 = vperm.xlu0 %1415, %v1398
      %v1417 = vpop.permute.xlu0 %1416
      %v1420 = vsel %vm728, %v1391, 0
      %v1423 = vsel %vm728, %v1392, 0
      %v1426 = vsel %vm728, %v1393, 0
      %v1429 = vsel %vm728, %v1394, 0
      %1431 = vmatpush.msra.mxu0 0.0
      %1432 = vmatpush.msra.mxu0 0.0
      %1433 = vmatpush.msra.mxu0 0.0
      %1434 = vmatpush.msra.mxu0 0.0
      %1435 = vmatpush.msra.mxu0 0.0
      %1436 = vmatpush.msra.mxu0 0.0
      %1437 = vmatpush.msra.mxu0 0.0
      %1438 = vmatpush.msra.mxu0 0.0
      %1439 = vmatpush.msra.mxu0 0.0
      %1440 = vmatpush.msra.mxu0 0.0
      %1441 = vmatpush.msra.mxu0 0.0
      %1442 = vmatpush.msra.mxu0 0.0
      %1443 = vmatpush.msra.mxu0 %v1389
      %1444 = vmatpush.msra.mxu0 %v1387
      %1445 = vmatpush.msra.mxu0 %v1385
      %1446 = vmatpush.msra.mxu0 %v1383
      %1447 = vmatmul.f32.gmra.mxu0 %v1420
      %v1448 = vpop.f32.mrf.mxu0
      %v1449 = vadd.f32 %v1402, %v1448
      %1450 = vmatmul.f32.gmra.mxu0 %v1423
      %v1451 = vpop.f32.mrf.mxu0
      %v1452 = vadd.f32 %v1407, %v1451
      %1453 = vmatmul.f32.gmra.mxu0 %v1426
      %v1454 = vpop.f32.mrf.mxu0
      %v1455 = vadd.f32 %v1412, %v1454
      %1456 = vmatmul.f32.gmra.mxu0 %v1429
      %v1457 = vpop.f32.mrf.mxu0
      %v1458 = vadd.f32 %v1417, %v1457
      %1459 = vdwg.mxu0
      %1460 = vmatpush.msra.mxu0 0.0
      %1461 = vmatpush.msra.mxu0 0.0
      %1462 = vmatpush.msra.mxu0 0.0
      %1463 = vmatpush.msra.mxu0 0.0
      %1464 = vmatpush.msra.mxu0 0.0
      %1465 = vmatpush.msra.mxu0 0.0
      %1466 = vmatpush.msra.mxu0 0.0
      %1467 = vmatpush.msra.mxu0 0.0
      %1468 = vmatpush.msra.mxu0 0.0
      %1469 = vmatpush.msra.mxu0 0.0
      %1470 = vmatpush.msra.mxu0 0.0
      %1471 = vmatpush.msra.mxu0 0.0
      %1472 = vmatpush.msra.mxu0 %v1390
      %1473 = vmatpush.msra.mxu0 %v1388
      %1474 = vmatpush.msra.mxu0 %v1386
      %1475 = vmatpush.msra.mxu0 %v1384
      %1476 = vmatmul.f32.gmra.mxu0 %v1420
      %v1477 = vpop.f32.mrf.mxu0
      %v1478 = vadd.f32 %v1402, %v1477
      %1479 = vmatmul.f32.gmra.mxu0 %v1423
      %v1480 = vpop.f32.mrf.mxu0
      %v1481 = vadd.f32 %v1407, %v1480
      %1482 = vmatmul.f32.gmra.mxu0 %v1426
      %v1483 = vpop.f32.mrf.mxu0
      %v1484 = vadd.f32 %v1412, %v1483
      %1485 = vmatmul.f32.gmra.mxu0 %v1429
      %v1486 = vpop.f32.mrf.mxu0
      %v1487 = vadd.f32 %v1417, %v1486
      %1488 = vdwg.mxu0
      %v1489 = vmax.f32 %v1449, 0.0
      %v1490 = vmax.f32 %v1478, 0.0
      %v1491 = vmax.f32 %v1452, 0.0
      %v1492 = vmax.f32 %v1481, 0.0
      %v1493 = vmax.f32 %v1455, 0.0
      %v1494 = vmax.f32 %v1484, 0.0
      %v1495 = vmax.f32 %v1458, 0.0
      %v1496 = vmax.f32 %v1487, 0.0
      %v1497 = vld [vmem:[%s7] sm:$0xff]
      %v1498 = vld [vmem:[%s7 + $0x8] sm:$0xff]
      %v1499 = vld [vmem:[%s7 + $0x10] sm:$0xff]
      %v1500 = vld [vmem:[%s7 + $0x18] sm:$0xff]
      %v1501 = vld [vmem:[%s7 + $0x20] sm:$0xff]
      %v1502 = vld [vmem:[%s7 + $0x28] sm:$0xff]
      %v1503 = vld [vmem:[%s8] sm:$0xff]
      %v1504 = vld [vmem:[%s8 + $0x8] sm:$0xff]
      %v1505 = vld [vmem:[%s8 + $0x10] sm:$0xff]
      %v1506 = vld [vmem:[%s8 + $0x18] sm:$0xff]
      %v1507 = vld [vmem:[%s8 + $0x20] sm:$0xff]
      %v1508 = vld [vmem:[%s8 + $0x28] sm:$0xff]
      %1510 = vset.pattern.permute.xlu0 0
      %1511 = vperm.xlu0 %1510, %v1503
      %v1512 = vpop.permute.xlu0 %1511
      %1515 = vset.pattern.permute.xlu0 0
      %1516 = vperm.xlu0 %1515, %v1504
      %v1517 = vpop.permute.xlu0 %1516
      %1520 = vset.pattern.permute.xlu0 0
      %1521 = vperm.xlu0 %1520, %v1505
      %v1522 = vpop.permute.xlu0 %1521
      %1525 = vset.pattern.permute.xlu0 0
      %1526 = vperm.xlu0 %1525, %v1506
      %v1527 = vpop.permute.xlu0 %1526
      %1530 = vset.pattern.permute.xlu0 0
      %1531 = vperm.xlu0 %1530, %v1507
      %v1532 = vpop.permute.xlu0 %1531
      %1535 = vset.pattern.permute.xlu0 0
      %1536 = vperm.xlu0 %1535, %v1508
      %v1537 = vpop.permute.xlu0 %1536
      %v1540 = vsel %vm728, %v1497, 0
      %v1543 = vsel %vm728, %v1498, 0
      %v1546 = vsel %vm728, %v1499, 0
      %v1549 = vsel %vm728, %v1500, 0
      %v1552 = vsel %vm728, %v1501, 0
      %v1555 = vsel %vm728, %v1502, 0
      %1557 = vmatpush.msra.mxu0 0.0
      %1558 = vmatpush.msra.mxu0 0.0
      %1559 = vmatpush.msra.mxu0 0.0
      %1560 = vmatpush.msra.mxu0 0.0
      %1561 = vmatpush.msra.mxu0 0.0
      %1562 = vmatpush.msra.mxu0 0.0
      %1563 = vmatpush.msra.mxu0 0.0
      %1564 = vmatpush.msra.mxu0 0.0
      %1565 = vmatpush.msra.mxu0 0.0
      %1566 = vmatpush.msra.mxu0 0.0
      %1567 = vmatpush.msra.mxu0 0.0
      %1568 = vmatpush.msra.mxu0 0.0
      %1569 = vmatpush.msra.mxu0 %v1495
      %1570 = vmatpush.msra.mxu0 %v1493
      %1571 = vmatpush.msra.mxu0 %v1491
      %1572 = vmatpush.msra.mxu0 %v1489
      %1573 = vmatmul.f32.gmra.mxu0 %v1540
      %v1574 = vpop.f32.mrf.mxu0
      %v1575 = vadd.f32 %v1512, %v1574
      %1576 = vmatmul.f32.gmra.mxu0 %v1543
      %v1577 = vpop.f32.mrf.mxu0
      %v1578 = vadd.f32 %v1517, %v1577
      %1579 = vmatmul.f32.gmra.mxu0 %v1546
      %v1580 = vpop.f32.mrf.mxu0
      %v1581 = vadd.f32 %v1522, %v1580
      %1582 = vmatmul.f32.gmra.mxu0 %v1549
      %v1583 = vpop.f32.mrf.mxu0
      %v1584 = vadd.f32 %v1527, %v1583
      %1585 = vmatmul.f32.gmra.mxu0 %v1552
      %v1586 = vpop.f32.mrf.mxu0
      %v1587 = vadd.f32 %v1532, %v1586
      %1588 = vmatmul.f32.gmra.mxu0 %v1555
      %v1589 = vpop.f32.mrf.mxu0
      %v1590 = vadd.f32 %v1537, %v1589
      %1591 = vdwg.mxu0
      %1592 = vmatpush.msra.mxu0 0.0
      %1593 = vmatpush.msra.mxu0 0.0
      %1594 = vmatpush.msra.mxu0 0.0
      %1595 = vmatpush.msra.mxu0 0.0
      %1596 = vmatpush.msra.mxu0 0.0
      %1597 = vmatpush.msra.mxu0 0.0
      %1598 = vmatpush.msra.mxu0 0.0
      %1599 = vmatpush.msra.mxu0 0.0
      %1600 = vmatpush.msra.mxu0 0.0
      %1601 = vmatpush.msra.mxu0 0.0
      %1602 = vmatpush.msra.mxu0 0.0
      %1603 = vmatpush.msra.mxu0 0.0
      %1604 = vmatpush.msra.mxu0 %v1496
      %1605 = vmatpush.msra.mxu0 %v1494
      %1606 = vmatpush.msra.mxu0 %v1492
      %1607 = vmatpush.msra.mxu0 %v1490
      %1608 = vmatmul.f32.gmra.mxu0 %v1540
      %v1609 = vpop.f32.mrf.mxu0
      %v1610 = vadd.f32 %v1512, %v1609
      %1611 = vmatmul.f32.gmra.mxu0 %v1543
      %v1612 = vpop.f32.mrf.mxu0
      %v1613 = vadd.f32 %v1517, %v1612
      %1614 = vmatmul.f32.gmra.mxu0 %v1546
      %v1615 = vpop.f32.mrf.mxu0
      %v1616 = vadd.f32 %v1522, %v1615
      %1617 = vmatmul.f32.gmra.mxu0 %v1549
      %v1618 = vpop.f32.mrf.mxu0
      %v1619 = vadd.f32 %v1527, %v1618
      %1620 = vmatmul.f32.gmra.mxu0 %v1552
      %v1621 = vpop.f32.mrf.mxu0
      %v1622 = vadd.f32 %v1532, %v1621
      %1623 = vmatmul.f32.gmra.mxu0 %v1555
      %v1624 = vpop.f32.mrf.mxu0
      %v1625 = vadd.f32 %v1537, %v1624
      %1626 = vdwg.mxu0
      %v1627 = vmax.f32 %v1575, 0.0
      %v1628 = vmax.f32 %v1610, 0.0
      %v1629 = vmax.f32 %v1578, 0.0
      %v1630 = vmax.f32 %v1613, 0.0
      %v1631 = vmax.f32 %v1581, 0.0
      %v1632 = vmax.f32 %v1616, 0.0
      %v1633 = vmax.f32 %v1584, 0.0
      %v1634 = vmax.f32 %v1619, 0.0
      %v1635 = vmax.f32 %v1587, 0.0
      %v1636 = vmax.f32 %v1622, 0.0
      %v1637 = vmax.f32 %v1590, 0.0
      %v1638 = vmax.f32 %v1625, 0.0
      %v1639 = vld [vmem:[%s9] sm:$0xff]
      %v1640 = vld [vmem:[%s9 + $0x8] sm:$0xff]
      %v1641 = vld [vmem:[%s9 + $0x10] sm:$0xff]
      %v1642 = vld [vmem:[%s9 + $0x18] sm:$0xff]
      %v1643 = vld [vmem:[%s9 + $0x20] sm:$0xff]
      %v1644 = vld [vmem:[%s9 + $0x28] sm:$0xff]
      %v1645 = vld [vmem:[%s9 + $0x30] sm:$0xff]
      %v1646 = vld [vmem:[%s9 + $0x38] sm:$0xff]
      %v1647 = vld [vmem:[%s10] sm:$0xff]
      %v1648 = vld [vmem:[%s10 + $0x8] sm:$0xff]
      %v1649 = vld [vmem:[%s10 + $0x10] sm:$0xff]
      %v1650 = vld [vmem:[%s10 + $0x18] sm:$0xff]
      %v1651 = vld [vmem:[%s10 + $0x20] sm:$0xff]
      %v1652 = vld [vmem:[%s10 + $0x28] sm:$0xff]
      %v1653 = vld [vmem:[%s10 + $0x30] sm:$0xff]
      %v1654 = vld [vmem:[%s10 + $0x38] sm:$0xff]
      %1656 = vset.pattern.permute.xlu0 0
      %1657 = vperm.xlu0 %1656, %v1647
      %v1658 = vpop.permute.xlu0 %1657
      %1661 = vset.pattern.permute.xlu0 0
      %1662 = vperm.xlu0 %1661, %v1648
      %v1663 = vpop.permute.xlu0 %1662
      %1666 = vset.pattern.permute.xlu0 0
      %1667 = vperm.xlu0 %1666, %v1649
      %v1668 = vpop.permute.xlu0 %1667
      %1671 = vset.pattern.permute.xlu0 0
      %1672 = vperm.xlu0 %1671, %v1650
      %v1673 = vpop.permute.xlu0 %1672
      %1676 = vset.pattern.permute.xlu0 0
      %1677 = vperm.xlu0 %1676, %v1651
      %v1678 = vpop.permute.xlu0 %1677
      %1681 = vset.pattern.permute.xlu0 0
      %1682 = vperm.xlu0 %1681, %v1652
      %v1683 = vpop.permute.xlu0 %1682
      %1686 = vset.pattern.permute.xlu0 0
      %1687 = vperm.xlu0 %1686, %v1653
      %v1688 = vpop.permute.xlu0 %1687
      %1691 = vset.pattern.permute.xlu0 0
      %1692 = vperm.xlu0 %1691, %v1654
      %v1693 = vpop.permute.xlu0 %1692
      %v1696 = vsel %vm621, %v1639, 0
      %v1699 = vsel %vm621, %v1640, 0
      %v1702 = vsel %vm621, %v1641, 0
      %v1705 = vsel %vm621, %v1642, 0
      %v1708 = vsel %vm621, %v1643, 0
      %v1711 = vsel %vm621, %v1644, 0
      %v1714 = vsel %vm621, %v1645, 0
      %v1717 = vsel %vm621, %v1646, 0
      %1719 = vmatpush.msra.mxu0 0.0
      %1720 = vmatpush.msra.mxu0 0.0
      %1721 = vmatpush.msra.mxu0 0.0
      %1722 = vmatpush.msra.mxu0 0.0
      %1723 = vmatpush.msra.mxu0 0.0
      %1724 = vmatpush.msra.mxu0 0.0
      %1725 = vmatpush.msra.mxu0 0.0
      %1726 = vmatpush.msra.mxu0 0.0
      %1727 = vmatpush.msra.mxu0 0.0
      %1728 = vmatpush.msra.mxu0 0.0
      %1729 = vmatpush.msra.mxu0 %v1637
      %1730 = vmatpush.msra.mxu0 %v1635
      %1731 = vmatpush.msra.mxu0 %v1633
      %1732 = vmatpush.msra.mxu0 %v1631
      %1733 = vmatpush.msra.mxu0 %v1629
      %1734 = vmatpush.msra.mxu0 %v1627
      %1735 = vmatmul.f32.gmra.mxu0 %v1696
      %v1736 = vpop.f32.mrf.mxu0
      %v1737 = vadd.f32 %v1658, %v1736
      %1738 = vmatmul.f32.gmra.mxu0 %v1699
      %v1739 = vpop.f32.mrf.mxu0
      %v1740 = vadd.f32 %v1663, %v1739
      %1741 = vmatmul.f32.gmra.mxu0 %v1702
      %v1742 = vpop.f32.mrf.mxu0
      %v1743 = vadd.f32 %v1668, %v1742
      %1744 = vmatmul.f32.gmra.mxu0 %v1705
      %v1745 = vpop.f32.mrf.mxu0
      %v1746 = vadd.f32 %v1673, %v1745
      %1747 = vmatmul.f32.gmra.mxu0 %v1708
      %v1748 = vpop.f32.mrf.mxu0
      %v1749 = vadd.f32 %v1678, %v1748
      %1750 = vmatmul.f32.gmra.mxu0 %v1711
      %v1751 = vpop.f32.mrf.mxu0
      %v1752 = vadd.f32 %v1683, %v1751
      %1753 = vmatmul.f32.gmra.mxu0 %v1714
      %v1754 = vpop.f32.mrf.mxu0
      %v1755 = vadd.f32 %v1688, %v1754
      %1756 = vmatmul.f32.gmra.mxu0 %v1717
      %v1757 = vpop.f32.mrf.mxu0
      %v1758 = vadd.f32 %v1693, %v1757
      %1759 = vdwg.mxu0
      %1760 = vmatpush.msra.mxu0 0.0
      %1761 = vmatpush.msra.mxu0 0.0
      %1762 = vmatpush.msra.mxu0 0.0
      %1763 = vmatpush.msra.mxu0 0.0
      %1764 = vmatpush.msra.mxu0 0.0
      %1765 = vmatpush.msra.mxu0 0.0
      %1766 = vmatpush.msra.mxu0 0.0
      %1767 = vmatpush.msra.mxu0 0.0
      %1768 = vmatpush.msra.mxu0 0.0
      %1769 = vmatpush.msra.mxu0 0.0
      %1770 = vmatpush.msra.mxu0 %v1638
      %1771 = vmatpush.msra.mxu0 %v1636
      %1772 = vmatpush.msra.mxu0 %v1634
      %1773 = vmatpush.msra.mxu0 %v1632
      %1774 = vmatpush.msra.mxu0 %v1630
      %1775 = vmatpush.msra.mxu0 %v1628
      %1776 = vmatmul.f32.gmra.mxu0 %v1696
      %v1777 = vpop.f32.mrf.mxu0
      %v1778 = vadd.f32 %v1658, %v1777
      %1779 = vmatmul.f32.gmra.mxu0 %v1699
      %v1780 = vpop.f32.mrf.mxu0
      %v1781 = vadd.f32 %v1663, %v1780
      %1782 = vmatmul.f32.gmra.mxu0 %v1702
      %v1783 = vpop.f32.mrf.mxu0
      %v1784 = vadd.f32 %v1668, %v1783
      %1785 = vmatmul.f32.gmra.mxu0 %v1705
      %v1786 = vpop.f32.mrf.mxu0
      %v1787 = vadd.f32 %v1673, %v1786
      %1788 = vmatmul.f32.gmra.mxu0 %v1708
      %v1789 = vpop.f32.mrf.mxu0
      %v1790 = vadd.f32 %v1678, %v1789
      %1791 = vmatmul.f32.gmra.mxu0 %v1711
      %v1792 = vpop.f32.mrf.mxu0
      %v1793 = vadd.f32 %v1683, %v1792
      %1794 = vmatmul.f32.gmra.mxu0 %v1714
      %v1795 = vpop.f32.mrf.mxu0
      %v1796 = vadd.f32 %v1688, %v1795
      %1797 = vmatmul.f32.gmra.mxu0 %v1717
      %v1798 = vpop.f32.mrf.mxu0
      %v1799 = vadd.f32 %v1693, %v1798
      %1800 = vdwg.mxu0
      %1801 = vst [vmem:[%s431 + $0x80] sm:$0xff] %v1737
      %1802 = vst [vmem:[%s431 + $0x88] sm:$0xff] %v1778
      %1803 = vst [vmem:[%s431 + $0x90] sm:$0xff] %v1740
      %1804 = vst [vmem:[%s431 + $0x98] sm:$0xff] %v1781
      %1805 = vst [vmem:[%s431 + $0xa0] sm:$0xff] %v1743
      %1806 = vst [vmem:[%s431 + $0xa8] sm:$0xff] %v1784
      %1807 = vst [vmem:[%s431 + $0xb0] sm:$0xff] %v1746
      %1808 = vst [vmem:[%s431 + $0xb8] sm:$0xff] %v1787
      %1809 = vst [vmem:[%s431 + $0xc0] sm:$0xff] %v1749
      %1810 = vst [vmem:[%s431 + $0xc8] sm:$0xff] %v1790
      %1811 = vst [vmem:[%s431 + $0xd0] sm:$0xff] %v1752
      %1812 = vst [vmem:[%s431 + $0xd8] sm:$0xff] %v1793
      %1813 = vst [vmem:[%s431 + $0xe0] sm:$0xff] %v1755
      %1814 = vst [vmem:[%s431 + $0xe8] sm:$0xff] %v1796
      %1815 = vst [vmem:[%s431 + $0xf0] sm:$0xff] %v1758
      %1816 = vst [vmem:[%s431 + $0xf8] sm:$0xff] %v1799
      %s1817 = smul.u32 16, %s26
      %s1818 = smul.u32 2, %s27
      %p1819 = scmp.lt.s32.totalorder %s1817, 31
      %s1820 = scalar_select %p1819, %s1817, 31
      %p1821 = scmp.lt.s32.totalorder %s1818, 1
      %s1822 = scalar_select %p1821, %s1818, 1
      %s1823 = smul.addr %s1820, 2
      %s1824 = sadd.s32 %s1822, %s1823
      %s1825 = smul.addr %s1824, 8
      %s1826 = scalar_lea.vmem %s11, %s1825
      // Predicated region
      $region65: #{featcae_forward.1} parent=63 // pred_check
        %p1827 = pneg %p292
      $region66: #{featcae_forward.1} parent=63 // pred_check_branch
        %1829 = sbr.rel (%p1827) target = $region68
      $region67: #{featcae_forward.1} parent=63 // pred_region
        %s1830 = smul.u32 16, %s26
        %s1831 = smul.u32 2, %s27
      $region68: #{featcae_forward.1} parent=63 // pred_fallthru
        _
    $region64: #{featcae_forward.1} parent=5 // pred_fallthru
      _
    %p1832 = scmp.le.s32.totalorder 2, %s17
    // Predicated region
    $region69: #{featcae_forward.1} parent=5 // pred_check
      %p1833 = pneg %p1832
    $region70: #{featcae_forward.1} parent=5 // pred_check_branch
      %1835 = sbr.rel (%p1833) target = $region72
    $region71: #{featcae_forward.1} parent=5 // pred_region
      %s1836 = ssub.s32 %s17, 2
      // Predicated region
      $region73: #{featcae_forward.1} parent=71 // pred_check
        %p1837 = pneg %p298
      $region74: #{featcae_forward.1} parent=71 // pred_check_branch
        %1839 = sbr.rel (%p1837) target = $region76
      $region75: #{featcae_forward.1} parent=71 // pred_region
        %s1840 = smul.u32 16, %s28
        %s1841 = smul.u32 2, %s29
        %p1842 = scmp.lt.s32.totalorder %s1840, 31
        %s1843 = scalar_select %p1842, %s1840, 31
        %p1844 = scmp.lt.s32.totalorder %s1841, 1
        %s1845 = scalar_select %p1844, %s1841, 1
        %s1846 = smul.addr %s1843, 2
        %s1847 = sadd.s32 %s1845, %s1846
        %s1848 = smul.addr %s1847, 8
        %s1849 = scalar_lea.vmem %s11, %s1848
      $region76: #{featcae_forward.1} parent=71 // pred_fallthru
        _
    $region72: #{featcae_forward.1} parent=5 // pred_fallthru
      _
  $region6: #{featcae_forward.1} parent=0 // loop_footer
    %s21 = sadd.s32 1, %s17
  $region7: #{featcae_forward.1} parent=0 // loop_footer_branch
    %16 = sbr.rel target = $region3
  $region8: #{featcae_forward.1} parent=0 // loop_exit
    _

</llo_original>
